<compile_context>
chip_gen: v5e
topology: v5e:2x2
jax: 0.10.0
libtpu: 0.0.40
codegen_flags: <defaults>
</compile_context>

<pallas_src>
import math

import jax
import jax.numpy as jnp
from jax.experimental import pallas as pl
from jax.experimental.pallas import tpu as pltpu

_LN_EPS = 1e-5  # nn.LayerNorm default


def _make_kernel(compute_dtype):
    """Fused expand + pixel-shuffle + grouped-LayerNorm kernel body."""

    def kernel(x_ref, w_ref, b_ref, g_ref, beta_ref, o_ref):
        # x_ref    : (blk_tokens, C)     input tokens (tokens on sublanes)
        # w_ref    : (2, C, 2*Ch)        expand weight, column block per p1
        # b_ref    : (2, 1, 2*Ch)        expand bias (f32)
        # g_ref    : (1, 2*Ch)           LayerNorm gamma tiled [g | g] (f32)
        # beta_ref : (1, 2*Ch)           LayerNorm beta  tiled [b | b] (f32)
        # o_ref    : (rows, 2, W, 2*Ch)  output in (h, p1, w, (p2 c)) order
        rows, _, width, two_ch = o_ref.shape
        ch = two_ch // 2
        inv_ch = 1.0 / ch

        x = x_ref[...]
        if compute_dtype is not None and x.dtype != compute_dtype:
            # In-kernel cast for the MXU feed: avoids an extra HBM pass over x.
            x = x.astype(compute_dtype)

        gamma = g_ref[...]                       # hoisted out of the p1 loop
        beta = beta_ref[...]
        # Lane mask selecting the p2=0 group.  All group handling below is
        # per-lane selects + full-width reductions: no sub-128 lane slices.
        lane = jax.lax.broadcasted_iota(jnp.int32, (1, two_ch), 1)
        lo = lane < ch

        for p1 in range(2):                      # unrolled: 2 dense output slabs
            # Linear for this p1 column block -> lane-dense (blk_tokens, 2*Ch).
            y = jnp.dot(x, w_ref[p1], preferred_element_type=jnp.float32)
            y = y + b_ref[p1]

            # Grouped LayerNorm over lanes [0, Ch) and [Ch, 2*Ch): masked sum
            # of the low half plus the total sum gives both group statistics.
            s_lo = jnp.sum(jnp.where(lo, y, 0.0), axis=-1, keepdims=True)
            s_all = jnp.sum(y, axis=-1, keepdims=True)
            mean = jnp.where(lo, s_lo * inv_ch, (s_all - s_lo) * inv_ch)
            cent = y - mean
            sq = cent * cent
            q_lo = jnp.sum(jnp.where(lo, sq, 0.0), axis=-1, keepdims=True)
            q_all = jnp.sum(sq, axis=-1, keepdims=True)
            rstd = jnp.where(lo,
                             jax.lax.rsqrt(q_lo * inv_ch + _LN_EPS),
                             jax.lax.rsqrt((q_all - q_lo) * inv_ch + _LN_EPS))
            out = cent * rstd * gamma + beta     # dense (blk_tokens, 2*Ch)

            # One dense, full-lane-width store per p1 slab.
            # TODO(synk): for C < 128 the 2*Ch lane axis is still lane-padded;
            # flattening (W, 2*Ch) into one lane axis would need an in-kernel
            # relayout, so it is left to a layout follow-up.
            o_ref[:, p1:p1 + 1, :, :] = out.reshape(
                rows, 1, width, two_ch).astype(o_ref.dtype)

    return kernel


def _cdiv(a, b):
    return -(-a // b)


def _ceil_to(a, m):
    return _cdiv(a, m) * m


def _choose_tiling(num_rows, width, target_tokens, sublane_multiple):
    """Pick (rows_per_block, padded_num_rows).

    Preference order: >=2 grid steps (pipelining + both v7x TensorCores),
    block tokens within the VMEM-derived target, an even number of steps,
    then the largest block.  Pads the row count only if no exact divisor
    yields >=2 aligned steps (avoids the grid=1 cliff).
    """

    def best_divisor(mult):
        best = None
        for d in range(1, num_rows + 1):
            if num_rows % d or (d * width) % mult:
                continue
            steps = num_rows // d
            score = (steps >= 2,                  # pipelining + 2 cores
                     d * width <= target_tokens,  # fits the VMEM budget
                     steps % 2 == 0,              # even sharding across cores
                     d * width)                   # then the biggest tile
            if best is None or score > best[1]:
                best = (d, score)
        return best

    for mult in sorted({sublane_multiple, 8}, reverse=True):
        cand = best_divisor(mult)
        if cand is not None and cand[1][0]:       # >=2 steps, no padding needed
            return cand[0], num_rows

    # No exact divisor gives >=2 steps: pad the row count instead of accepting
    # a single-step grid (no DMA/compute overlap, one idle v7x TensorCore).
    base = sublane_multiple // math.gcd(sublane_multiple, width)
    rows = base
    while ((rows + base) * width <= target_tokens
           and _cdiv(num_rows, rows + base) >= 2):
        rows += base
    if _cdiv(num_rows, rows) >= 2:
        return rows, _cdiv(num_rows, rows) * rows

    # Tiny input: a single full-extent block is all there is.
    return num_rows, num_rows


def patch_expand(x, hw_shape, w, b, gamma, beta, *,
                 compute_dtype=jnp.bfloat16, out_dtype=None,
                 target_block_tokens=None):
    """PatchExpand forward: y = LayerNorm_{C/2}(pixel_shuffle_2x2(x @ w + b)).

    x     : (B, L, C), L == H*W
    w     : (C, 2C)   (y = x @ w + b, matching nn.Linear(C, 2C))
    b     : (2C,)
    gamma : (C//2,)   LayerNorm weight
    beta  : (C//2,)   LayerNorm bias

    compute_dtype : MXU feed dtype (default bf16; f32 accumulation and f32
                    LayerNorm math regardless).  None keeps x's dtype.
    out_dtype     : output dtype (default x.dtype).  Pass jnp.bfloat16 for
                    full bf16 I/O on the HBM-bandwidth-bound store side.
    target_block_tokens : tile-size knob; default is generation-aware.

    Returns (y, (2H, 2H)) with y: (B, 4*H*W, C//2).
    """
    B, L, C = x.shape
    H, W = hw_shape
    assert L == H * W, (L, H, W)
    assert C % 2 == 0
    assert w.shape == (C, 2 * C) and b.shape == (2 * C,)
    Ch = C // 2
    num_rows = B * H          # image rows across the whole batch
    tokens = B * L

    if out_dtype is None:
        out_dtype = x.dtype
    out_dtype = jnp.dtype(out_dtype)
    if compute_dtype is not None:
        compute_dtype = jnp.dtype(compute_dtype)

    # --- Parameter prep (tiny tensors; host/XLA side). ------------------------
    # Weight repacked as (p1, C, 2*Ch): column block p1 holds, back to back,
    # the channels of groups (p2=0 | p2=1) that land in output row-parity p1,
    # so each in-kernel matmul already produces a lane-dense p1 output slab.
    w3 = w.reshape(C, 2, 2 * Ch).transpose(1, 0, 2)
    if compute_dtype is not None:
        w3 = w3.astype(compute_dtype)
    b3 = b.reshape(2, 1, 2 * Ch).astype(jnp.float32)
    # gamma/beta tiled over (p2=0 | p2=1) so the affine step is one dense FMA.
    g2 = jnp.tile(gamma.reshape(1, Ch), (1, 2)).astype(jnp.float32)
    beta2 = jnp.tile(beta.reshape(1, Ch), (1, 2)).astype(jnp.float32)

    x2d = x.reshape(tokens, C)

    # --- Generation-aware tile / VMEM budgeting. ------------------------------
    in_item = jnp.dtype(x.dtype).itemsize
    w_item = jnp.dtype(w3.dtype).itemsize
    out_item = out_dtype.itemsize

    try:
        phys_vmem = int(pltpu.get_tpu_info().vmem_capacity_bytes)
    except Exception:  # non-TPU tracing / older jax: assume the smallest (v7x)
        phys_vmem = 64 * 1024 * 1024
    vmem_cap = phys_vmem * 3 // 4        # ~48 MiB on v7x, ~96 MiB on v5e/v6e

    if target_block_tokens is None:
        # Smaller default tiles on v7x (64 MiB VMEM), bigger on v5e/v6e.
        target_block_tokens = 1024 if phys_vmem <= 64 * 1024 * 1024 else 2048

    # Sub-32-bit dtypes pack along sublanes: keep the token block aligned.
    dt_sizes = [in_item, out_item] + ([w_item] if compute_dtype is not None else [])
    sublane_multiple = {4: 8, 2: 16, 1: 32}.get(min(dt_sizes), 8)

    lane_c = _ceil_to(C, 128)
    lane_2ch = _ceil_to(2 * Ch, 128)
    # Grid-invariant operands: single-buffered weight + small f32 params.
    # TODO(synk): K-tile the resident weight for very large C on v7x's 64 MiB.
    w_bytes = 2 * _ceil_to(C, 8) * lane_2ch * w_item
    param_bytes = 4 * 8 * lane_2ch * 4
    # Per-token VMEM: double-buffered x & out tiles + f32 temporaries
    # (one p1 slab of y/cent/sq/out live at a time).
    per_token = (2 * lane_c * in_item + 4 * lane_2ch * out_item
                 + 4 * lane_2ch * 4)
    headroom = vmem_cap - w_bytes - param_bytes - (2 << 20)
    max_tokens = max(headroom // per_token, sublane_multiple)
    target = int(min(target_block_tokens, max_tokens))

    rows, num_rows_p = _choose_tiling(num_rows, W, target, sublane_multiple)
    blk_tokens = rows * W
    if num_rows_p != num_rows:
        x2d = jnp.pad(x2d, ((0, (num_rows_p - num_rows) * W), (0, 0)))
    grid = (num_rows_p // rows,)

    vmem_needed = (2 * _ceil_to(blk_tokens, 8) * lane_c * in_item          # x (2x)
                   + 2 * rows * 2 * _ceil_to(W, 8) * lane_2ch * out_item   # out (2x)
                   + 4 * _ceil_to(blk_tokens, 8) * lane_2ch * 4            # f32 temps
                   + w_bytes + param_bytes + (1 << 20))                    # + slack
    vmem_limit = int(min(vmem_cap, max(vmem_needed, 16 * 1024 * 1024)))

    cost = pl.CostEstimate(
        flops=2 * tokens * C * (2 * C),
        transcendentals=4 * tokens,      # one rsqrt per (token, p1, p2) group
        bytes_accessed=(tokens * C * in_item + 2 * C * 2 * Ch * w_item
                        + tokens * 2 * C * out_item),
    )

    def _invariant_spec(block_shape):
        index_map = lambda i: (0,) * len(block_shape)
        try:   # never re-fetched -> single-buffer it (saves VMEM headroom)
            return pl.BlockSpec(block_shape, index_map,
                                pipeline_mode=pl.Buffered(1))
        except Exception:  # older jax: fall back to the default double buffer
            return pl.BlockSpec(block_shape, index_map)

    out4 = pl.pallas_call(
        _make_kernel(compute_dtype),
        out_shape=jax.ShapeDtypeStruct((num_rows_p, 2, W, 2 * Ch), out_dtype),
        grid_spec=pltpu.PrefetchScalarGridSpec(
            num_scalar_prefetch=0,
            grid=grid,
            in_specs=[
                pl.BlockSpec((blk_tokens, C), lambda i: (i, 0)),   # x tile
                _invariant_spec((2, C, 2 * Ch)),                   # weight
                _invariant_spec((2, 1, 2 * Ch)),                   # bias
                _invariant_spec((1, 2 * Ch)),                      # LN gamma (tiled)
                _invariant_spec((1, 2 * Ch)),                      # LN beta (tiled)
            ],
            out_specs=pl.BlockSpec((rows, 2, W, 2 * Ch),
                                   lambda i: (i, 0, 0, 0)),
        ),
        compiler_params=pltpu.CompilerParams(
            dimension_semantics=("parallel",),
            vmem_limit_bytes=vmem_limit,
        ),
        cost_estimate=cost,
    )(x2d, w3, b3, g2, beta2)

    if num_rows_p != num_rows:
        out4 = out4[:num_rows]
    # (B*H, 2, W, 2*Ch) is already 'b (h p1) (w p2) c' row-major order, so this
    # is a pure metadata reshape (no HBM transpose).
    y = out4.reshape(B, 4 * H * W, Ch)

    # NOTE: the reference module returns (H*2, H*2) (not W*2); reproduced
    # verbatim -- only meaningful when H == W.
    return y, (H * 2, H * 2)


def _reference(x, hw_shape, w, b, gamma, beta):
    B, L, C = x.shape
    H, W = hw_shape
    Ch = C // 2
    y = (x.reshape(B, H, W, C).astype(jnp.float32) @ w.astype(jnp.float32)
         + b.astype(jnp.float32))
    y = y.reshape(B, H, W, 2, 2, Ch)
    y = jnp.transpose(y, (0, 1, 3, 2, 4, 5)).reshape(B, 4 * H * W, Ch)
    mean = jnp.mean(y, axis=-1, keepdims=True)
    var = jnp.mean((y - mean) ** 2, axis=-1, keepdims=True)
    y = (y - mean) * jax.lax.rsqrt(var + _LN_EPS) * gamma + beta
    return y, (H * 2, H * 2)


if __name__ == "__main__":
    B, H, W, C = 2, 8, 8, 32
    L = H * W
    Ch = C // 2

    key = jax.random.PRNGKey(0)
    kx, kw, kb, kg, kbeta = jax.random.split(key, 5)

    x = jax.random.normal(kx, (B, L, C), dtype=jnp.float32)
    # Deterministic synthetic parameters (nn.Linear(C, 2C) + nn.LayerNorm(C//2)).
    w = jax.random.normal(kw, (C, 2 * C), dtype=jnp.float32) * 0.05
    b = jax.random.normal(kb, (2 * C,), dtype=jnp.float32) * 0.05
    gamma = 1.0 + 0.05 * jax.random.normal(kg, (Ch,), dtype=jnp.float32)
    beta = 0.05 * jax.random.normal(kbeta, (Ch,), dtype=jnp.float32)

    ref, ref_hw = _reference(x, (H, W), w, b, gamma, beta)

    # Exact-semantics path (f32 matmul): tight tolerance.
    out_f32, hw_f32 = patch_expand(x, (H, W), w, b, gamma, beta,
                                   compute_dtype=None)
    out_f32 = jax.block_until_ready(out_f32)
    assert out_f32.shape == (B, 4 * H * W, Ch), out_f32.shape
    assert hw_f32 == ref_hw
    err32 = float(jnp.max(jnp.abs(out_f32 - ref)))
    assert jnp.allclose(out_f32, ref, atol=1e-4, rtol=1e-4), err32

    # Default performance path (bf16 MXU feed, f32 accumulate + f32 LN math).
    out_bf, hw_bf = patch_expand(x, (H, W), w, b, gamma, beta)
    out_bf = jax.block_until_ready(out_bf)
    assert out_bf.shape == (B, 4 * H * W, Ch), out_bf.shape
    assert hw_bf == ref_hw
    errbf = float(jnp.max(jnp.abs(out_bf.astype(jnp.float32) - ref)))
    assert jnp.allclose(out_bf.astype(jnp.float32), ref,
                        atol=3e-2, rtol=3e-2), errbf

    print("KERNEL_OK")
</pallas_src>

<mosaic_0001>
module attributes {stable_mosaic.version = 11 : i64} {
  func.func @kernel(%arg0: i32, %arg1: memref<64x32xf32, #tpu.memory_space<vmem>>, %arg2: memref<2x32x32xf32, #tpu.memory_space<vmem>>, %arg3: memref<2x1x32xf32, #tpu.memory_space<vmem>>, %arg4: memref<1x32xf32, #tpu.memory_space<vmem>>, %arg5: memref<1x32xf32, #tpu.memory_space<vmem>>, %arg6: memref<8x2x8x32xf32, #tpu.memory_space<vmem>>) attributes {dimension_semantics = [#tpu.dimension_semantics<parallel>], iteration_bounds = array<i64: 2>, scalar_prefetch = 0 : i64, scratch_operands = 0 : i64, tpu.core_type = #tpu.core_type<tc>, window_params = [{transform_indices = @transform_0, window_bounds = array<i64: 64, 32>}, {pipeline_mode = #tpu.pipeline_mode<synchronous>, transform_indices = @transform_1, window_bounds = array<i64: 2, 32, 32>}, {pipeline_mode = #tpu.pipeline_mode<synchronous>, transform_indices = @transform_2, window_bounds = array<i64: 2, 1, 32>}, {pipeline_mode = #tpu.pipeline_mode<synchronous>, transform_indices = @transform_3, window_bounds = array<i64: 1, 32>}, {pipeline_mode = #tpu.pipeline_mode<synchronous>, transform_indices = @transform_4, window_bounds = array<i64: 1, 32>}, {transform_indices = @transform_5, window_bounds = array<i64: 8, 2, 8, 32>}]} {
    %c0 = arith.constant 0 : index
    %c0_0 = arith.constant 0 : index
    %0 = vector.load %arg1[%c0, %c0_0] : memref<64x32xf32, #tpu.memory_space<vmem>>, vector<64x32xf32>
    %c0_1 = arith.constant 0 : index
    %c0_2 = arith.constant 0 : index
    %1 = vector.load %arg4[%c0_1, %c0_2] : memref<1x32xf32, #tpu.memory_space<vmem>>, vector<1x32xf32>
    %c0_3 = arith.constant 0 : index
    %c0_4 = arith.constant 0 : index
    %2 = vector.load %arg5[%c0_3, %c0_4] : memref<1x32xf32, #tpu.memory_space<vmem>>, vector<1x32xf32>
    %3 = tpu.iota {dimensions = array<i32: 1>} : vector<1x32xi32>
    %c16_i32 = arith.constant 16 : i32
    %4 = vector.broadcast %c16_i32 : i32 to vector<1x32xi32>
    %5 = arith.cmpi slt, %3, %4 : vector<1x32xi32>
    %c0_5 = arith.constant 0 : index
    %c0_6 = arith.constant 0 : index
    %c0_7 = arith.constant 0 : index
    %6 = vector.load %arg2[%c0_5, %c0_6, %c0_7] : memref<2x32x32xf32, #tpu.memory_space<vmem>>, vector<1x32x32xf32>
    %7 = vector.shape_cast %6 : vector<1x32x32xf32> to vector<32x32xf32>
    %cst = arith.constant dense<0.000000e+00> : vector<64x32xf32>
    %8 = tpu.matmul %0, %7, %cst {dimension_numbers = #tpu.dot_dimension_numbers<[1], [0], [0], [1], [0, 0, 1, 1], [], []>} : vector<64x32xf32>, vector<32x32xf32>, vector<64x32xf32> -> vector<64x32xf32>
    %c0_8 = arith.constant 0 : index
    %c0_9 = arith.constant 0 : index
    %c0_10 = arith.constant 0 : index
    %9 = vector.load %arg3[%c0_8, %c0_9, %c0_10] : memref<2x1x32xf32, #tpu.memory_space<vmem>>, vector<1x1x32xf32>
    %10 = vector.shape_cast %9 : vector<1x1x32xf32> to vector<1x32xf32>
    %11 = vector.broadcast %10 : vector<1x32xf32> to vector<64x32xf32>
    %12 = arith.addf %8, %11 : vector<64x32xf32>
    %cst_11 = arith.constant 0.000000e+00 : f32
    %13 = vector.shape_cast %5 : vector<1x32xi1> to vector<1x32xi1>
    %14 = vector.broadcast %13 : vector<1x32xi1> to vector<64x32xi1>
    %15 = vector.broadcast %cst_11 : f32 to vector<64x32xf32>
    %16 = arith.select %14, %12, %15 : vector<64x32xi1>, vector<64x32xf32>
    %cst_12 = arith.constant dense<0.000000e+00> : vector<64xf32>
    %17 = vector.multi_reduction <add>, %16, %cst_12 [1] : vector<64x32xf32> to vector<64xf32>
    %18 = vector.shape_cast %17 : vector<64xf32> to vector<64x1xf32>
    %cst_13 = arith.constant dense<0.000000e+00> : vector<64xf32>
    %19 = vector.multi_reduction <add>, %12, %cst_13 [1] : vector<64x32xf32> to vector<64xf32>
    %20 = vector.shape_cast %19 : vector<64xf32> to vector<64x1xf32>
    %cst_14 = arith.constant 6.250000e-02 : f32
    %21 = vector.broadcast %cst_14 : f32 to vector<64x1xf32>
    %22 = arith.mulf %18, %21 : vector<64x1xf32>
    %23 = arith.subf %20, %18 : vector<64x1xf32>
    %cst_15 = arith.constant 6.250000e-02 : f32
    %24 = vector.broadcast %cst_15 : f32 to vector<64x1xf32>
    %25 = arith.mulf %23, %24 : vector<64x1xf32>
    %26 = vector.shape_cast %5 : vector<1x32xi1> to vector<1x32xi1>
    %27 = vector.broadcast %26 : vector<1x32xi1> to vector<64x32xi1>
    %28 = vector.shape_cast %22 : vector<64x1xf32> to vector<64x1xf32>
    %29 = vector.broadcast %28 : vector<64x1xf32> to vector<64x32xf32>
    %30 = vector.shape_cast %25 : vector<64x1xf32> to vector<64x1xf32>
    %31 = vector.broadcast %30 : vector<64x1xf32> to vector<64x32xf32>
    %32 = arith.select %27, %29, %31 : vector<64x32xi1>, vector<64x32xf32>
    %33 = arith.subf %12, %32 : vector<64x32xf32>
    %34 = arith.mulf %33, %33 : vector<64x32xf32>
    %cst_16 = arith.constant 0.000000e+00 : f32
    %35 = vector.shape_cast %5 : vector<1x32xi1> to vector<1x32xi1>
    %36 = vector.broadcast %35 : vector<1x32xi1> to vector<64x32xi1>
    %37 = vector.broadcast %cst_16 : f32 to vector<64x32xf32>
    %38 = arith.select %36, %34, %37 : vector<64x32xi1>, vector<64x32xf32>
    %cst_17 = arith.constant dense<0.000000e+00> : vector<64xf32>
    %39 = vector.multi_reduction <add>, %38, %cst_17 [1] : vector<64x32xf32> to vector<64xf32>
    %40 = vector.shape_cast %39 : vector<64xf32> to vector<64x1xf32>
    %cst_18 = arith.constant dense<0.000000e+00> : vector<64xf32>
    %41 = vector.multi_reduction <add>, %34, %cst_18 [1] : vector<64x32xf32> to vector<64xf32>
    %42 = vector.shape_cast %41 : vector<64xf32> to vector<64x1xf32>
    %cst_19 = arith.constant 6.250000e-02 : f32
    %43 = vector.broadcast %cst_19 : f32 to vector<64x1xf32>
    %44 = arith.mulf %40, %43 : vector<64x1xf32>
    %cst_20 = arith.constant 9.99999974E-6 : f32
    %45 = vector.broadcast %cst_20 : f32 to vector<64x1xf32>
    %46 = arith.addf %44, %45 : vector<64x1xf32>
    %47 = math.rsqrt %46 : vector<64x1xf32>
    %48 = arith.subf %42, %40 : vector<64x1xf32>
    %cst_21 = arith.constant 6.250000e-02 : f32
    %49 = vector.broadcast %cst_21 : f32 to vector<64x1xf32>
    %50 = arith.mulf %48, %49 : vector<64x1xf32>
    %cst_22 = arith.constant 9.99999974E-6 : f32
    %51 = vector.broadcast %cst_22 : f32 to vector<64x1xf32>
    %52 = arith.addf %50, %51 : vector<64x1xf32>
    %53 = math.rsqrt %52 : vector<64x1xf32>
    %54 = vector.shape_cast %5 : vector<1x32xi1> to vector<1x32xi1>
    %55 = vector.broadcast %54 : vector<1x32xi1> to vector<64x32xi1>
    %56 = vector.shape_cast %47 : vector<64x1xf32> to vector<64x1xf32>
    %57 = vector.broadcast %56 : vector<64x1xf32> to vector<64x32xf32>
    %58 = vector.shape_cast %53 : vector<64x1xf32> to vector<64x1xf32>
    %59 = vector.broadcast %58 : vector<64x1xf32> to vector<64x32xf32>
    %60 = arith.select %55, %57, %59 : vector<64x32xi1>, vector<64x32xf32>
    %61 = arith.mulf %33, %60 : vector<64x32xf32>
    %62 = vector.broadcast %1 : vector<1x32xf32> to vector<64x32xf32>
    %63 = arith.mulf %61, %62 : vector<64x32xf32>
    %64 = vector.broadcast %2 : vector<1x32xf32> to vector<64x32xf32>
    %65 = arith.addf %63, %64 : vector<64x32xf32>
    %66 = vector.shape_cast %65 : vector<64x32xf32> to vector<8x1x8x32xf32>
    %c0_23 = arith.constant 0 : index
    %c0_24 = arith.constant 0 : index
    %c0_25 = arith.constant 0 : index
    %c0_26 = arith.constant 0 : index
    %67 = vector.load %arg6[%c0_23, %c0_24, %c0_25, %c0_26] : memref<8x2x8x32xf32, #tpu.memory_space<vmem>>, vector<8x1x8x32xf32>
    tpu.vector_store %arg6[%c0_23, %c0_24, %c0_25, %c0_26], %66 {strides = array<i32>} : memref<8x2x8x32xf32, #tpu.memory_space<vmem>>, vector<8x1x8x32xf32>,
    %c1 = arith.constant 1 : index
    %c0_27 = arith.constant 0 : index
    %c0_28 = arith.constant 0 : index
    %68 = vector.load %arg2[%c1, %c0_27, %c0_28] : memref<2x32x32xf32, #tpu.memory_space<vmem>>, vector<1x32x32xf32>
    %69 = vector.shape_cast %68 : vector<1x32x32xf32> to vector<32x32xf32>
    %cst_29 = arith.constant dense<0.000000e+00> : vector<64x32xf32>
    %70 = tpu.matmul %0, %69, %cst_29 {dimension_numbers = #tpu.dot_dimension_numbers<[1], [0], [0], [1], [0, 0, 1, 1], [], []>} : vector<64x32xf32>, vector<32x32xf32>, vector<64x32xf32> -> vector<64x32xf32>
    %c1_30 = arith.constant 1 : index
    %c0_31 = arith.constant 0 : index
    %c0_32 = arith.constant 0 : index
    %71 = vector.load %arg3[%c1_30, %c0_31, %c0_32] : memref<2x1x32xf32, #tpu.memory_space<vmem>>, vector<1x1x32xf32>
    %72 = vector.shape_cast %71 : vector<1x1x32xf32> to vector<1x32xf32>
    %73 = vector.broadcast %72 : vector<1x32xf32> to vector<64x32xf32>
    %74 = arith.addf %70, %73 : vector<64x32xf32>
    %cst_33 = arith.constant 0.000000e+00 : f32
    %75 = vector.shape_cast %5 : vector<1x32xi1> to vector<1x32xi1>
    %76 = vector.broadcast %75 : vector<1x32xi1> to vector<64x32xi1>
    %77 = vector.broadcast %cst_33 : f32 to vector<64x32xf32>
    %78 = arith.select %76, %74, %77 : vector<64x32xi1>, vector<64x32xf32>
    %cst_34 = arith.constant dense<0.000000e+00> : vector<64xf32>
    %79 = vector.multi_reduction <add>, %78, %cst_34 [1] : vector<64x32xf32> to vector<64xf32>
    %80 = vector.shape_cast %79 : vector<64xf32> to vector<64x1xf32>
    %cst_35 = arith.constant dense<0.000000e+00> : vector<64xf32>
    %81 = vector.multi_reduction <add>, %74, %cst_35 [1] : vector<64x32xf32> to vector<64xf32>
    %82 = vector.shape_cast %81 : vector<64xf32> to vector<64x1xf32>
    %cst_36 = arith.constant 6.250000e-02 : f32
    %83 = vector.broadcast %cst_36 : f32 to vector<64x1xf32>
    %84 = arith.mulf %80, %83 : vector<64x1xf32>
    %85 = arith.subf %82, %80 : vector<64x1xf32>
    %cst_37 = arith.constant 6.250000e-02 : f32
    %86 = vector.broadcast %cst_37 : f32 to vector<64x1xf32>
    %87 = arith.mulf %85, %86 : vector<64x1xf32>
    %88 = vector.shape_cast %5 : vector<1x32xi1> to vector<1x32xi1>
    %89 = vector.broadcast %88 : vector<1x32xi1> to vector<64x32xi1>
    %90 = vector.shape_cast %84 : vector<64x1xf32> to vector<64x1xf32>
    %91 = vector.broadcast %90 : vector<64x1xf32> to vector<64x32xf32>
    %92 = vector.shape_cast %87 : vector<64x1xf32> to vector<64x1xf32>
    %93 = vector.broadcast %92 : vector<64x1xf32> to vector<64x32xf32>
    %94 = arith.select %89, %91, %93 : vector<64x32xi1>, vector<64x32xf32>
    %95 = arith.subf %74, %94 : vector<64x32xf32>
    %96 = arith.mulf %95, %95 : vector<64x32xf32>
    %cst_38 = arith.constant 0.000000e+00 : f32
    %97 = vector.shape_cast %5 : vector<1x32xi1> to vector<1x32xi1>
    %98 = vector.broadcast %97 : vector<1x32xi1> to vector<64x32xi1>
    %99 = vector.broadcast %cst_38 : f32 to vector<64x32xf32>
    %100 = arith.select %98, %96, %99 : vector<64x32xi1>, vector<64x32xf32>
    %cst_39 = arith.constant dense<0.000000e+00> : vector<64xf32>
    %101 = vector.multi_reduction <add>, %100, %cst_39 [1] : vector<64x32xf32> to vector<64xf32>
    %102 = vector.shape_cast %101 : vector<64xf32> to vector<64x1xf32>
    %cst_40 = arith.constant dense<0.000000e+00> : vector<64xf32>
    %103 = vector.multi_reduction <add>, %96, %cst_40 [1] : vector<64x32xf32> to vector<64xf32>
    %104 = vector.shape_cast %103 : vector<64xf32> to vector<64x1xf32>
    %cst_41 = arith.constant 6.250000e-02 : f32
    %105 = vector.broadcast %cst_41 : f32 to vector<64x1xf32>
    %106 = arith.mulf %102, %105 : vector<64x1xf32>
    %cst_42 = arith.constant 9.99999974E-6 : f32
    %107 = vector.broadcast %cst_42 : f32 to vector<64x1xf32>
    %108 = arith.addf %106, %107 : vector<64x1xf32>
    %109 = math.rsqrt %108 : vector<64x1xf32>
    %110 = arith.subf %104, %102 : vector<64x1xf32>
    %cst_43 = arith.constant 6.250000e-02 : f32
    %111 = vector.broadcast %cst_43 : f32 to vector<64x1xf32>
    %112 = arith.mulf %110, %111 : vector<64x1xf32>
    %cst_44 = arith.constant 9.99999974E-6 : f32
    %113 = vector.broadcast %cst_44 : f32 to vector<64x1xf32>
    %114 = arith.addf %112, %113 : vector<64x1xf32>
    %115 = math.rsqrt %114 : vector<64x1xf32>
    %116 = vector.shape_cast %5 : vector<1x32xi1> to vector<1x32xi1>
    %117 = vector.broadcast %116 : vector<1x32xi1> to vector<64x32xi1>
    %118 = vector.shape_cast %109 : vector<64x1xf32> to vector<64x1xf32>
    %119 = vector.broadcast %118 : vector<64x1xf32> to vector<64x32xf32>
    %120 = vector.shape_cast %115 : vector<64x1xf32> to vector<64x1xf32>
    %121 = vector.broadcast %120 : vector<64x1xf32> to vector<64x32xf32>
    %122 = arith.select %117, %119, %121 : vector<64x32xi1>, vector<64x32xf32>
    %123 = arith.mulf %95, %122 : vector<64x32xf32>
    %124 = vector.broadcast %1 : vector<1x32xf32> to vector<64x32xf32>
    %125 = arith.mulf %123, %124 : vector<64x32xf32>
    %126 = vector.broadcast %2 : vector<1x32xf32> to vector<64x32xf32>
    %127 = arith.addf %125, %126 : vector<64x32xf32>
    %128 = vector.shape_cast %127 : vector<64x32xf32> to vector<8x1x8x32xf32>
    %c0_45 = arith.constant 0 : index
    %c1_46 = arith.constant 1 : index
    %c0_47 = arith.constant 0 : index
    %c0_48 = arith.constant 0 : index
    %129 = vector.load %arg6[%c0_45, %c1_46, %c0_47, %c0_48] : memref<8x2x8x32xf32, #tpu.memory_space<vmem>>, vector<8x1x8x32xf32>
    tpu.vector_store %arg6[%c0_45, %c1_46, %c0_47, %c0_48], %128 {strides = array<i32>} : memref<8x2x8x32xf32, #tpu.memory_space<vmem>>, vector<8x1x8x32xf32>,
    return
  }
  func.func @transform_0(%arg0: i32) -> (i32, i32) {
    %c0_i32 = arith.constant 0 : i32
    %c0_i32_0 = arith.constant 0 : i32
    return %arg0, %c0_i32 : i32, i32
  }
  func.func @transform_1(%arg0: i32) -> (i32, i32, i32) {
    %c0_i32 = arith.constant 0 : i32
    %c0_i32_0 = arith.constant 0 : i32
    %c0_i32_1 = arith.constant 0 : i32
    %c0_i32_2 = arith.constant 0 : i32
    return %c0_i32, %c0_i32_0, %c0_i32_1 : i32, i32, i32
  }
  func.func @transform_2(%arg0: i32) -> (i32, i32, i32) {
    %c0_i32 = arith.constant 0 : i32
    %c0_i32_0 = arith.constant 0 : i32
    %c0_i32_1 = arith.constant 0 : i32
    %c0_i32_2 = arith.constant 0 : i32
    return %c0_i32, %c0_i32_0, %c0_i32_1 : i32, i32, i32
  }
  func.func @transform_3(%arg0: i32) -> (i32, i32) {
    %c0_i32 = arith.constant 0 : i32
    %c0_i32_0 = arith.constant 0 : i32
    %c0_i32_1 = arith.constant 0 : i32
    return %c0_i32, %c0_i32_0 : i32, i32
  }
  func.func @transform_4(%arg0: i32) -> (i32, i32) {
    %c0_i32 = arith.constant 0 : i32
    %c0_i32_0 = arith.constant 0 : i32
    %c0_i32_1 = arith.constant 0 : i32
    return %c0_i32, %c0_i32_0 : i32, i32
  }
  func.func @transform_5(%arg0: i32) -> (i32, i32, i32, i32) {
    %c0_i32 = arith.constant 0 : i32
    %c0_i32_0 = arith.constant 0 : i32
    %c0_i32_1 = arith.constant 0 : i32
    %c0_i32_2 = arith.constant 0 : i32
    return %arg0, %c0_i32, %c0_i32_0, %c0_i32_1 : i32, i32, i32, i32
  }
}

</mosaic_0001>

<llo_original>
// kernel: tpu_custom_call.1
$region0: #{tpu_custom_call.1}
  #allocation0 [shape = 'u32[]', space=smem, size = 0x4, offset = 0x4, fixed_abs, tag = 'smem constant byte address 0x4 - core index']
  #allocation1 [shape = 'u32[72,128]{1,0:T(1,128)}', space=vmem, size = 0x9000, scoped, tag = 'internal scratch']
  %s0 = inlined_call_operand.vmem [shape: f32[128,32], index: 0, kind: input, shape index: {}]
  %s1 = inlined_call_operand.vmem [shape: f32[2,32,32], index: 1, kind: input, shape index: {}]
  %s2 = inlined_call_operand.vmem [shape: f32[2,1,32], index: 2, kind: input, shape index: {}]
  %s3 = inlined_call_operand.vmem [shape: f32[1,32], index: 3, kind: input, shape index: {}]
  %s4 = inlined_call_operand.vmem [shape: f32[1,32], index: 4, kind: input, shape index: {}]
  %s5 = inlined_call_operand.hbm [shape: f32[16,2,8,32], index: 5, kind: output, shape index: {}]
  %s6 = sld [smem:[#allocation0]]
  $region53: #{tpu_custom_call.1} parent=0
    _
  %s8 = ssub.s32 1, %s6
  %s9 = scalar_select 0, %s8, %s6
  $region1: #{tpu_custom_call.1} parent=0
    #allocation2 [shape = 'u8[131072]{0}', space=vmem, size = 0x20000, scoped, tag = 'output window, operand 0']
    #allocation3 [shape = 's32[2]{0}', space=sflag, size = 0x8, scoped, tag = 'scoped memory for tpu_custom_call.1']
    %10 = vsyncpa [#allocation3], 0
    %s11 = scalar_lea.sflag [#allocation3], 1
    %12 = vsyncpa %s11, 0
    loop: start=0, step=1, limit=4
    $region2: #{tpu_custom_call.1} parent=1 // loop_pre_header
      _
    $region3: #{tpu_custom_call.1} parent=1 // loop_header
      %s14 = sphi 0, %s18
      %p15 = scmp.ge.s32.totalorder %s14, 4
      %s24 = sphi 0, %s26
      %s27 = sphi 0, %s24
      %s28 = sphi 0, %s27
      %s44 = sphi 0, %s28
      %s48 = sphi 0, %s48
      %s50 = sphi 0, %s48
      %s51 = sphi 0, %s50
      %s65 = sphi 0, %s51
      %s69 = sphi 0, %s69
      %s71 = sphi 0, %s69
      %s72 = sphi 0, %s71
      %s86 = sphi 0, %s72
      %s90 = sphi 0, %s90
      %s92 = sphi 0, %s90
      %s93 = sphi 0, %s92
      %s107 = sphi 0, %s93
      %s111 = sphi 0, %s111
      %s113 = sphi 0, %s111
      %s114 = sphi 0, %s113
      %s128 = sphi 0, %s114
      %s134 = sphi 0, %s136
      %s137 = sphi 0, %s134
      %s138 = sphi 0, %s137
      %s154 = sphi 0, %s138
    $region4: #{tpu_custom_call.1} parent=1 // loop_header_branch
      %17 = sbr.rel (%p15) target = $region8
    $region5: #{tpu_custom_call.1} parent=1 // loop_body
      %s19 = ssub.s32 %s14, 1
      %s20 = ssub.s32 %s14, 2
      %s21 = sadd.s32 %s14, 1
      %s22 = ssub.s32 %s14, %s21
      %p23 = scmp.eq.s32.totalorder %s22, 0
      %s25 = sadd.s32 %s24, 1
      %s26 = scalar_select %p23, %s24, %s25
      %p29 = pneg %p23
      %p30 = scmp.eq.s32.totalorder %s14, 1
      %p31 = por %p29, %p30
      %p32 = scmp.ne.s32.totalorder %s24, %s27
      %p33 = scmp.eq.s32.totalorder %s14, 0
      %p34 = por %p32, %p33
      %p35 = scmp.ne.s32.totalorder %s24, %s27
      %p36 = scmp.eq.s32.totalorder %s19, 1
      %p37 = por %p35, %p36
      %p38 = scmp.ne.s32.totalorder %s27, %s28
      %p39 = scmp.eq.s32.totalorder %s19, 0
      %p40 = por %p38, %p39
      %p41 = scmp.ne.s32.totalorder %s27, %s28
      %p42 = scmp.eq.s32.totalorder %s20, 1
      %p43 = por %p41, %p42
      %p45 = scmp.ne.s32.totalorder %s28, %s44
      %p46 = scmp.eq.s32.totalorder %s20, 0
      %p47 = por %p45, %p46
      %s49 = sadd.s32 %s48, 1
      %p52 = scmp.eq.s32.totalorder %s14, 1
      %p53 = scmp.ne.s32.totalorder %s48, %s50
      %p54 = scmp.eq.s32.totalorder %s14, 0
      %p55 = por %p53, %p54
      %p56 = scmp.ne.s32.totalorder %s48, %s50
      %p57 = scmp.eq.s32.totalorder %s19, 1
      %p58 = por %p56, %p57
      %p59 = scmp.ne.s32.totalorder %s50, %s51
      %p60 = scmp.eq.s32.totalorder %s19, 0
      %p61 = por %p59, %p60
      %p62 = scmp.ne.s32.totalorder %s50, %s51
      %p63 = scmp.eq.s32.totalorder %s20, 1
      %p64 = por %p62, %p63
      %p66 = scmp.ne.s32.totalorder %s51, %s65
      %p67 = scmp.eq.s32.totalorder %s20, 0
      %p68 = por %p66, %p67
      %s70 = sadd.s32 %s69, 1
      %p73 = scmp.eq.s32.totalorder %s14, 1
      %p74 = scmp.ne.s32.totalorder %s69, %s71
      %p75 = scmp.eq.s32.totalorder %s14, 0
      %p76 = por %p74, %p75
      %p77 = scmp.ne.s32.totalorder %s69, %s71
      %p78 = scmp.eq.s32.totalorder %s19, 1
      %p79 = por %p77, %p78
      %p80 = scmp.ne.s32.totalorder %s71, %s72
      %p81 = scmp.eq.s32.totalorder %s19, 0
      %p82 = por %p80, %p81
      %p83 = scmp.ne.s32.totalorder %s71, %s72
      %p84 = scmp.eq.s32.totalorder %s20, 1
      %p85 = por %p83, %p84
      %p87 = scmp.ne.s32.totalorder %s72, %s86
      %p88 = scmp.eq.s32.totalorder %s20, 0
      %p89 = por %p87, %p88
      %s91 = sadd.s32 %s90, 1
      %p94 = scmp.eq.s32.totalorder %s14, 1
      %p95 = scmp.ne.s32.totalorder %s90, %s92
      %p96 = scmp.eq.s32.totalorder %s14, 0
      %p97 = por %p95, %p96
      %p98 = scmp.ne.s32.totalorder %s90, %s92
      %p99 = scmp.eq.s32.totalorder %s19, 1
      %p100 = por %p98, %p99
      %p101 = scmp.ne.s32.totalorder %s92, %s93
      %p102 = scmp.eq.s32.totalorder %s19, 0
      %p103 = por %p101, %p102
      %p104 = scmp.ne.s32.totalorder %s92, %s93
      %p105 = scmp.eq.s32.totalorder %s20, 1
      %p106 = por %p104, %p105
      %p108 = scmp.ne.s32.totalorder %s93, %s107
      %p109 = scmp.eq.s32.totalorder %s20, 0
      %p110 = por %p108, %p109
      %s112 = sadd.s32 %s111, 1
      %p115 = scmp.eq.s32.totalorder %s14, 1
      %p116 = scmp.ne.s32.totalorder %s111, %s113
      %p117 = scmp.eq.s32.totalorder %s14, 0
      %p118 = por %p116, %p117
      %p119 = scmp.ne.s32.totalorder %s111, %s113
      %p120 = scmp.eq.s32.totalorder %s19, 1
      %p121 = por %p119, %p120
      %p122 = scmp.ne.s32.totalorder %s113, %s114
      %p123 = scmp.eq.s32.totalorder %s19, 0
      %p124 = por %p122, %p123
      %p125 = scmp.ne.s32.totalorder %s113, %s114
      %p126 = scmp.eq.s32.totalorder %s20, 1
      %p127 = por %p125, %p126
      %p129 = scmp.ne.s32.totalorder %s114, %s128
      %p130 = scmp.eq.s32.totalorder %s20, 0
      %p131 = por %p129, %p130
      %s132 = ssub.s32 %s14, %s21
      %p133 = scmp.eq.s32.totalorder %s132, 0
      %s135 = sadd.s32 %s134, 1
      %s136 = scalar_select %p133, %s134, %s135
      %p139 = pneg %p133
      %p140 = scmp.eq.s32.totalorder %s14, 1
      %p141 = por %p139, %p140
      %p142 = scmp.ne.s32.totalorder %s134, %s137
      %p143 = scmp.eq.s32.totalorder %s14, 0
      %p144 = por %p142, %p143
      %p145 = scmp.ne.s32.totalorder %s134, %s137
      %p146 = scmp.eq.s32.totalorder %s19, 1
      %p147 = por %p145, %p146
      %p148 = scmp.ne.s32.totalorder %s137, %s138
      %p149 = scmp.eq.s32.totalorder %s19, 0
      %p150 = por %p148, %p149
      %p151 = scmp.ne.s32.totalorder %s137, %s138
      %p152 = scmp.eq.s32.totalorder %s20, 1
      %p153 = por %p151, %p152
      %p155 = scmp.ne.s32.totalorder %s138, %s154
      %p156 = scmp.eq.s32.totalorder %s20, 0
      %p157 = por %p155, %p156
      %p158 = scmp.le.s32.totalorder 1, %s14
      %p159 = scmp.lt.s32.totalorder %s14, 3
      %p160 = pnand %p158, %p159
      %p161 = pneg %p160
      // Predicated region
      $region9: #{tpu_custom_call.1} parent=5 // pred_check
        _
      $region10: #{tpu_custom_call.1} parent=5 // pred_check_branch
        %163 = sbr.rel (%p160) target = $region12
      $region11: #{tpu_custom_call.1} parent=5 // pred_region
        %s164 = ssub.s32 %s14, 1
        // Predicated region
        $region13: #{tpu_custom_call.1} parent=11 // pred_check
          %p165 = pneg %p61
        $region14: #{tpu_custom_call.1} parent=11 // pred_check_branch
          %167 = sbr.rel (%p165) target = $region16
        $region15: #{tpu_custom_call.1} parent=11 // pred_region
          _
        $region16: #{tpu_custom_call.1} parent=11 // pred_fallthru
          _
        // Predicated region
        $region17: #{tpu_custom_call.1} parent=11 // pred_check
          %p168 = pneg %p82
        $region18: #{tpu_custom_call.1} parent=11 // pred_check_branch
          %170 = sbr.rel (%p168) target = $region20
        $region19: #{tpu_custom_call.1} parent=11 // pred_region
          _
        $region20: #{tpu_custom_call.1} parent=11 // pred_fallthru
          _
        // Predicated region
        $region21: #{tpu_custom_call.1} parent=11 // pred_check
          %p171 = pneg %p103
        $region22: #{tpu_custom_call.1} parent=11 // pred_check_branch
          %173 = sbr.rel (%p171) target = $region24
        $region23: #{tpu_custom_call.1} parent=11 // pred_region
          _
        $region24: #{tpu_custom_call.1} parent=11 // pred_fallthru
          _
        // Predicated region
        $region25: #{tpu_custom_call.1} parent=11 // pred_check
          %p174 = pneg %p124
        $region26: #{tpu_custom_call.1} parent=11 // pred_check_branch
          %176 = sbr.rel (%p174) target = $region28
        $region27: #{tpu_custom_call.1} parent=11 // pred_region
          _
        $region28: #{tpu_custom_call.1} parent=11 // pred_fallthru
          _
      $region12: #{tpu_custom_call.1} parent=5 // pred_fallthru
        _
      %p177 = scmp.lt.s32.totalorder %s14, 2
      // Predicated region
      $region29: #{tpu_custom_call.1} parent=5 // pred_check
        %p178 = pneg %p177
      $region30: #{tpu_custom_call.1} parent=5 // pred_check_branch
        %180 = sbr.rel (%p178) target = $region32
      $region31: #{tpu_custom_call.1} parent=5 // pred_region
        // Predicated region
        $region33: #{tpu_custom_call.1} parent=31 // pred_check
          %p181 = pneg %p34
        $region34: #{tpu_custom_call.1} parent=31 // pred_check_branch
          %183 = sbr.rel (%p181) target = $region36
        $region35: #{tpu_custom_call.1} parent=31 // pred_region
          %s184 = smul.u32 8, %s14
          %p185 = scmp.lt.s32.totalorder %s184, 15
          %s186 = scalar_select %p185, %s184, 15
          %s187 = smul.addr %s186, 8
          %s188 = scalar_lea.vmem %s0, %s187
          %s189 = smul.u32 8, %s14
        $region36: #{tpu_custom_call.1} parent=31 // pred_fallthru
          _
      $region32: #{tpu_custom_call.1} parent=5 // pred_fallthru
        _
      %p190 = scmp.le.s32.totalorder 1, %s14
      %p191 = scmp.lt.s32.totalorder %s14, 3
      %p192 = pnand %p190, %p191
      %p193 = pneg %p192
      // Predicated region
      $region37: #{tpu_custom_call.1} parent=5 // pred_check
        _
      $region38: #{tpu_custom_call.1} parent=5 // pred_check_branch
        %195 = sbr.rel (%p192) target = $region40
      $region39: #{tpu_custom_call.1} parent=5 // pred_region
        %s196 = ssub.s32 %s14, 1
        %s197 = smul.u32 8, %s19
        %p198 = scmp.lt.s32.totalorder %s197, 15
        %s199 = scalar_select %p198, %s197, 15
        %s200 = smul.addr %s199, 8
        %s201 = scalar_lea.vmem %s0, %s200
        %p202 = pneg %p40
        %p203 = pneg %p37
        %p204 = pneg %p61
        %p205 = pneg %p58
        %p206 = pneg %p82
        %p207 = pneg %p79
        %p208 = pneg %p103
        %p209 = pneg %p100
        %p210 = pneg %p124
        %p211 = pneg %p121
        %p212 = pneg %p150
        %p213 = pneg %p147
        %s214 = sand.u32 %s137, 1
        %s215 = scalar_lea.sflag [#allocation3], %s214
        %s216 = sand.u32 %s137, 1
        %s217 = smul.addr %s216, 128
        %s218 = scalar_lea.vmem [#allocation2], %s217
        %s219 = smul.u32 8, %s19
        %p220 = scmp.lt.s32.totalorder %s219, 15
        %s221 = scalar_select %p220, %s219, 15
        %s222 = smul.addr %s221, 8
        %s223 = scalar_lea.vmem %s0, %s222
        %s224 = smul.u32 8, %s19
        %s225 = smul.u32 8, %s19
        %v226 = vld [vmem:[%s223] sm:$0xff]
        %v227 = vld [vmem:[%s223 + $0x8] sm:$0xff]
        %v228 = vld [vmem:[%s223 + $0x10] sm:$0xff]
        %v229 = vld [vmem:[%s223 + $0x18] sm:$0xff]
        %v230 = vld [vmem:[%s223 + $0x20] sm:$0xff]
        %v231 = vld [vmem:[%s223 + $0x28] sm:$0xff]
        %v232 = vld [vmem:[%s223 + $0x30] sm:$0xff]
        %v233 = vld [vmem:[%s223 + $0x38] sm:$0xff]
        %v234 = vld [vmem:[%s3] sm:$0x1]
        %v235 = vld [vmem:[%s4] sm:$0x1]
        %v236 = vlaneseq
        %v237 = vand.u32 %v236, 127
        %vm238 = vcmp.lt.s32.totalorder %v237, 16
        %v239 = vld [vmem:[%s1] sm:$0xff]
        %v240 = vld [vmem:[%s1 + $0x8] sm:$0xff]
        %v241 = vld [vmem:[%s1 + $0x10] sm:$0xff]
        %v242 = vld [vmem:[%s1 + $0x18] sm:$0xff]
        %v243 = vld [vmem:[%s2] sm:$0x1]
        %v245 = vperm.slane %v243, 0
        %vm247 = vcmask 261120
        %v249 = vsel %vm247, %v226, 0
        %v252 = vsel %vm247, %v227, 0
        %v255 = vsel %vm247, %v228, 0
        %v258 = vsel %vm247, %v229, 0
        %v261 = vsel %vm247, %v230, 0
        %v264 = vsel %vm247, %v231, 0
        %v267 = vsel %vm247, %v232, 0
        %v270 = vsel %vm247, %v233, 0
        %272 = vmatpush.msra.mxu0 0.0
        %273 = vmatpush.msra.mxu0 0.0
        %274 = vmatpush.msra.mxu0 0.0
        %275 = vmatpush.msra.mxu0 0.0
        %276 = vmatpush.msra.mxu0 0.0
        %277 = vmatpush.msra.mxu0 0.0
        %278 = vmatpush.msra.mxu0 0.0
        %279 = vmatpush.msra.mxu0 0.0
        %280 = vmatpush.msra.mxu0 0.0
        %281 = vmatpush.msra.mxu0 0.0
        %282 = vmatpush.msra.mxu0 0.0
        %283 = vmatpush.msra.mxu0 0.0
        %284 = vmatpush.msra.mxu0 %v242
        %285 = vmatpush.msra.mxu0 %v241
        %286 = vmatpush.msra.mxu0 %v240
        %287 = vmatpush.msra.mxu0 %v239
        %288 = vmatmul.f32.gmra.mxu0 %v249
        %v289 = vpop.f32.mrf.mxu0
        %v290 = vadd.f32 %v245, %v289
        %291 = vmatmul.f32.gmra.mxu0 %v252
        %v292 = vpop.f32.mrf.mxu0
        %v293 = vadd.f32 %v245, %v292
        %294 = vmatmul.f32.gmra.mxu0 %v255
        %v295 = vpop.f32.mrf.mxu0
        %v296 = vadd.f32 %v245, %v295
        %297 = vmatmul.f32.gmra.mxu0 %v258
        %v298 = vpop.f32.mrf.mxu0
        %v299 = vadd.f32 %v245, %v298
        %300 = vmatmul.f32.gmra.mxu0 %v261
        %v301 = vpop.f32.mrf.mxu0
        %v302 = vadd.f32 %v245, %v301
        %303 = vmatmul.f32.gmra.mxu0 %v264
        %v304 = vpop.f32.mrf.mxu0
        %v305 = vadd.f32 %v245, %v304
        %306 = vmatmul.f32.gmra.mxu0 %v267
        %v307 = vpop.f32.mrf.mxu0
        %v308 = vadd.f32 %v245, %v307
        %309 = vmatmul.f32.gmra.mxu0 %v270
        %v310 = vpop.f32.mrf.mxu0
        %v311 = vadd.f32 %v245, %v310
        %312 = vdwg.mxu0
        %v313 = vsel %vm238, 1, 0
        %vm314 = vcmp.eq.s32.totalorder %v313, 1
        %v315 = vsel %vm314, %v290, 0.0
        %v316 = vsel %vm314, %v293, 0.0
        %v317 = vsel %vm314, %v296, 0.0
        %v318 = vsel %vm314, %v299, 0.0
        %v319 = vsel %vm314, %v302, 0.0
        %v320 = vsel %vm314, %v305, 0.0
        %v321 = vsel %vm314, %v308, 0.0
        %v322 = vsel %vm314, %v311, 0.0
        %v323 = vsel %vm247, %v315, 0.0
        %324 = vadd.xlane.f32.xlu0 %v323
        %v325 = vpop.xlane.xlu0 %324
        %v326 = vsel %vm247, %v316, 0.0
        %327 = vadd.xlane.f32.xlu0 %v326
        %v328 = vpop.xlane.xlu0 %327
        %v329 = vsel %vm247, %v317, 0.0
        %330 = vadd.xlane.f32.xlu0 %v329
        %v331 = vpop.xlane.xlu0 %330
        %v332 = vsel %vm247, %v318, 0.0
        %333 = vadd.xlane.f32.xlu0 %v332
        %v334 = vpop.xlane.xlu0 %333
        %v335 = vsel %vm247, %v319, 0.0
        %336 = vadd.xlane.f32.xlu0 %v335
        %v337 = vpop.xlane.xlu0 %336
        %v338 = vsel %vm247, %v320, 0.0
        %339 = vadd.xlane.f32.xlu0 %v338
        %v340 = vpop.xlane.xlu0 %339
        %v341 = vsel %vm247, %v321, 0.0
        %342 = vadd.xlane.f32.xlu0 %v341
        %v343 = vpop.xlane.xlu0 %342
        %v344 = vsel %vm247, %v322, 0.0
        %345 = vadd.xlane.f32.xlu0 %v344
        %v346 = vpop.xlane.xlu0 %345
        %v347 = vsel %vm247, %v290, 0.0
        %348 = vadd.xlane.f32.xlu0 %v347
        %v349 = vpop.xlane.xlu0 %348
        %v350 = vsel %vm247, %v293, 0.0
        %351 = vadd.xlane.f32.xlu0 %v350
        %v352 = vpop.xlane.xlu0 %351
        %v353 = vsel %vm247, %v296, 0.0
        %354 = vadd.xlane.f32.xlu0 %v353
        %v355 = vpop.xlane.xlu0 %354
        %v356 = vsel %vm247, %v299, 0.0
        %357 = vadd.xlane.f32.xlu0 %v356
        %v358 = vpop.xlane.xlu0 %357
        %v359 = vsel %vm247, %v302, 0.0
        %360 = vadd.xlane.f32.xlu0 %v359
        %v361 = vpop.xlane.xlu0 %360
        %v362 = vsel %vm247, %v305, 0.0
        %363 = vadd.xlane.f32.xlu0 %v362
        %v364 = vpop.xlane.xlu0 %363
        %v365 = vsel %vm247, %v308, 0.0
        %366 = vadd.xlane.f32.xlu0 %v365
        %v367 = vpop.xlane.xlu0 %366
        %v368 = vsel %vm247, %v311, 0.0
        %369 = vadd.xlane.f32.xlu0 %v368
        %v370 = vpop.xlane.xlu0 %369
        %v371 = vmul.f32 %v325, 0.0625
        %v372 = vmul.f32 %v328, 0.0625
        %v373 = vmul.f32 %v331, 0.0625
        %v374 = vmul.f32 %v334, 0.0625
        %v375 = vmul.f32 %v337, 0.0625
        %v376 = vmul.f32 %v340, 0.0625
        %v377 = vmul.f32 %v343, 0.0625
        %v378 = vmul.f32 %v346, 0.0625
        %v379 = vsub.f32 %v349, %v325
        %v380 = vsub.f32 %v352, %v328
        %v381 = vsub.f32 %v355, %v331
        %v382 = vsub.f32 %v358, %v334
        %v383 = vsub.f32 %v361, %v337
        %v384 = vsub.f32 %v364, %v340
        %v385 = vsub.f32 %v367, %v343
        %v386 = vsub.f32 %v370, %v346
        %v387 = vmul.f32 %v379, 0.0625
        %v388 = vmul.f32 %v380, 0.0625
        %v389 = vmul.f32 %v381, 0.0625
        %v390 = vmul.f32 %v382, 0.0625
        %v391 = vmul.f32 %v383, 0.0625
        %v392 = vmul.f32 %v384, 0.0625
        %v393 = vmul.f32 %v385, 0.0625
        %v394 = vmul.f32 %v386, 0.0625
        %v395 = vsel %vm314, %v371, %v387
        %v396 = vsel %vm314, %v372, %v388
        %v397 = vsel %vm314, %v373, %v389
        %v398 = vsel %vm314, %v374, %v390
        %v399 = vsel %vm314, %v375, %v391
        %v400 = vsel %vm314, %v376, %v392
        %v401 = vsel %vm314, %v377, %v393
        %v402 = vsel %vm314, %v378, %v394
        %v403 = vsub.f32 %v290, %v395
        %v404 = vsub.f32 %v293, %v396
        %v405 = vsub.f32 %v296, %v397
        %v406 = vsub.f32 %v299, %v398
        %v407 = vsub.f32 %v302, %v399
        %v408 = vsub.f32 %v305, %v400
        %v409 = vsub.f32 %v308, %v401
        %v410 = vsub.f32 %v311, %v402
        %v411 = vmul.f32 %v403, %v403
        %v412 = vmul.f32 %v404, %v404
        %v413 = vmul.f32 %v405, %v405
        %v414 = vmul.f32 %v406, %v406
        %v415 = vmul.f32 %v407, %v407
        %v416 = vmul.f32 %v408, %v408
        %v417 = vmul.f32 %v409, %v409
        %v418 = vmul.f32 %v410, %v410
        %v419 = vsel %vm314, %v411, 0.0
        %v420 = vsel %vm314, %v412, 0.0
        %v421 = vsel %vm314, %v413, 0.0
        %v422 = vsel %vm314, %v414, 0.0
        %v423 = vsel %vm314, %v415, 0.0
        %v424 = vsel %vm314, %v416, 0.0
        %v425 = vsel %vm314, %v417, 0.0
        %v426 = vsel %vm314, %v418, 0.0
        %v427 = vsel %vm247, %v419, 0.0
        %428 = vadd.xlane.f32.xlu0 %v427
        %v429 = vpop.xlane.xlu0 %428
        %v430 = vsel %vm247, %v420, 0.0
        %431 = vadd.xlane.f32.xlu0 %v430
        %v432 = vpop.xlane.xlu0 %431
        %v433 = vsel %vm247, %v421, 0.0
        %434 = vadd.xlane.f32.xlu0 %v433
        %v435 = vpop.xlane.xlu0 %434
        %v436 = vsel %vm247, %v422, 0.0
        %437 = vadd.xlane.f32.xlu0 %v436
        %v438 = vpop.xlane.xlu0 %437
        %v439 = vsel %vm247, %v423, 0.0
        %440 = vadd.xlane.f32.xlu0 %v439
        %v441 = vpop.xlane.xlu0 %440
        %v442 = vsel %vm247, %v424, 0.0
        %443 = vadd.xlane.f32.xlu0 %v442
        %v444 = vpop.xlane.xlu0 %443
        %v445 = vsel %vm247, %v425, 0.0
        %446 = vadd.xlane.f32.xlu0 %v445
        %v447 = vpop.xlane.xlu0 %446
        %v448 = vsel %vm247, %v426, 0.0
        %449 = vadd.xlane.f32.xlu0 %v448
        %v450 = vpop.xlane.xlu0 %449
        %v451 = vsel %vm247, %v411, 0.0
        %452 = vadd.xlane.f32.xlu0 %v451
        %v453 = vpop.xlane.xlu0 %452
        %v454 = vsel %vm247, %v412, 0.0
        %455 = vadd.xlane.f32.xlu0 %v454
        %v456 = vpop.xlane.xlu0 %455
        %v457 = vsel %vm247, %v413, 0.0
        %458 = vadd.xlane.f32.xlu0 %v457
        %v459 = vpop.xlane.xlu0 %458
        %v460 = vsel %vm247, %v414, 0.0
        %461 = vadd.xlane.f32.xlu0 %v460
        %v462 = vpop.xlane.xlu0 %461
        %v463 = vsel %vm247, %v415, 0.0
        %464 = vadd.xlane.f32.xlu0 %v463
        %v465 = vpop.xlane.xlu0 %464
        %v466 = vsel %vm247, %v416, 0.0
        %467 = vadd.xlane.f32.xlu0 %v466
        %v468 = vpop.xlane.xlu0 %467
        %v469 = vsel %vm247, %v417, 0.0
        %470 = vadd.xlane.f32.xlu0 %v469
        %v471 = vpop.xlane.xlu0 %470
        %v472 = vsel %vm247, %v418, 0.0
        %473 = vadd.xlane.f32.xlu0 %v472
        %v474 = vpop.xlane.xlu0 %473
        %v475 = vmul.f32 %v429, 0.0625
        %v476 = vmul.f32 %v432, 0.0625
        %v477 = vmul.f32 %v435, 0.0625
        %v478 = vmul.f32 %v438, 0.0625
        %v479 = vmul.f32 %v441, 0.0625
        %v480 = vmul.f32 %v444, 0.0625
        %v481 = vmul.f32 %v447, 0.0625
        %v482 = vmul.f32 %v450, 0.0625
        %v483 = vadd.f32 %v475, 1e-05
        %v484 = vadd.f32 %v476, 1e-05
        %v485 = vadd.f32 %v477, 1e-05
        %v486 = vadd.f32 %v478, 1e-05
        %v487 = vadd.f32 %v479, 1e-05
        %v488 = vadd.f32 %v480, 1e-05
        %v489 = vadd.f32 %v481, 1e-05
        %v490 = vadd.f32 %v482, 1e-05
        %v491 = vrsqrt.pop %v483
        %v492 = vmul.f32 %v491, %v483
        %v493 = vmul.f32 %v492, %v491
        %v494 = vmul.f32 0.5, %v493
        %v495 = vsub.f32 1.5, %v494
        %v496 = vmul.f32 %v491, %v495
        %vm497 = vweird.f32 %v483
        %vm498 = vweird.f32 %v491
        %vm499 = vmor %vm497, %vm498
        %v500 = vsel %vm499, %v491, %v496
        %v501 = vrsqrt.pop %v484
        %v502 = vmul.f32 %v501, %v484
        %v503 = vmul.f32 %v502, %v501
        %v504 = vmul.f32 0.5, %v503
        %v505 = vsub.f32 1.5, %v504
        %v506 = vmul.f32 %v501, %v505
        %vm507 = vweird.f32 %v484
        %vm508 = vweird.f32 %v501
        %vm509 = vmor %vm507, %vm508
        %v510 = vsel %vm509, %v501, %v506
        %v511 = vrsqrt.pop %v485
        %v512 = vmul.f32 %v511, %v485
        %v513 = vmul.f32 %v512, %v511
        %v514 = vmul.f32 0.5, %v513
        %v515 = vsub.f32 1.5, %v514
        %v516 = vmul.f32 %v511, %v515
        %vm517 = vweird.f32 %v485
        %vm518 = vweird.f32 %v511
        %vm519 = vmor %vm517, %vm518
        %v520 = vsel %vm519, %v511, %v516
        %v521 = vrsqrt.pop %v486
        %v522 = vmul.f32 %v521, %v486
        %v523 = vmul.f32 %v522, %v521
        %v524 = vmul.f32 0.5, %v523
        %v525 = vsub.f32 1.5, %v524
        %v526 = vmul.f32 %v521, %v525
        %vm527 = vweird.f32 %v486
        %vm528 = vweird.f32 %v521
        %vm529 = vmor %vm527, %vm528
        %v530 = vsel %vm529, %v521, %v526
        %v531 = vrsqrt.pop %v487
        %v532 = vmul.f32 %v531, %v487
        %v533 = vmul.f32 %v532, %v531
        %v534 = vmul.f32 0.5, %v533
        %v535 = vsub.f32 1.5, %v534
        %v536 = vmul.f32 %v531, %v535
        %vm537 = vweird.f32 %v487
        %vm538 = vweird.f32 %v531
        %vm539 = vmor %vm537, %vm538
        %v540 = vsel %vm539, %v531, %v536
        %v541 = vrsqrt.pop %v488
        %v542 = vmul.f32 %v541, %v488
        %v543 = vmul.f32 %v542, %v541
        %v544 = vmul.f32 0.5, %v543
        %v545 = vsub.f32 1.5, %v544
        %v546 = vmul.f32 %v541, %v545
        %vm547 = vweird.f32 %v488
        %vm548 = vweird.f32 %v541
        %vm549 = vmor %vm547, %vm548
        %v550 = vsel %vm549, %v541, %v546
        %v551 = vrsqrt.pop %v489
        %v552 = vmul.f32 %v551, %v489
        %v553 = vmul.f32 %v552, %v551
        %v554 = vmul.f32 0.5, %v553
        %v555 = vsub.f32 1.5, %v554
        %v556 = vmul.f32 %v551, %v555
        %vm557 = vweird.f32 %v489
        %vm558 = vweird.f32 %v551
        %vm559 = vmor %vm557, %vm558
        %v560 = vsel %vm559, %v551, %v556
        %v561 = vrsqrt.pop %v490
        %v562 = vmul.f32 %v561, %v490
        %v563 = vmul.f32 %v562, %v561
        %v564 = vmul.f32 0.5, %v563
        %v565 = vsub.f32 1.5, %v564
        %v566 = vmul.f32 %v561, %v565
        %vm567 = vweird.f32 %v490
        %vm568 = vweird.f32 %v561
        %vm569 = vmor %vm567, %vm568
        %v570 = vsel %vm569, %v561, %v566
        %v571 = vsub.f32 %v453, %v429
        %v572 = vsub.f32 %v456, %v432
        %v573 = vsub.f32 %v459, %v435
        %v574 = vsub.f32 %v462, %v438
        %v575 = vsub.f32 %v465, %v441
        %v576 = vsub.f32 %v468, %v444
        %v577 = vsub.f32 %v471, %v447
        %v578 = vsub.f32 %v474, %v450
        %v579 = vmul.f32 %v571, 0.0625
        %v580 = vmul.f32 %v572, 0.0625
        %v581 = vmul.f32 %v573, 0.0625
        %v582 = vmul.f32 %v574, 0.0625
        %v583 = vmul.f32 %v575, 0.0625
        %v584 = vmul.f32 %v576, 0.0625
        %v585 = vmul.f32 %v577, 0.0625
        %v586 = vmul.f32 %v578, 0.0625
        %v587 = vadd.f32 %v579, 1e-05
        %v588 = vadd.f32 %v580, 1e-05
        %v589 = vadd.f32 %v581, 1e-05
        %v590 = vadd.f32 %v582, 1e-05
        %v591 = vadd.f32 %v583, 1e-05
        %v592 = vadd.f32 %v584, 1e-05
        %v593 = vadd.f32 %v585, 1e-05
        %v594 = vadd.f32 %v586, 1e-05
        %v595 = vrsqrt.pop %v587
        %v596 = vmul.f32 %v595, %v587
        %v597 = vmul.f32 %v596, %v595
        %v598 = vmul.f32 0.5, %v597
        %v599 = vsub.f32 1.5, %v598
        %v600 = vmul.f32 %v595, %v599
        %vm601 = vweird.f32 %v587
        %vm602 = vweird.f32 %v595
        %vm603 = vmor %vm601, %vm602
        %v604 = vsel %vm603, %v595, %v600
        %v605 = vrsqrt.pop %v588
        %v606 = vmul.f32 %v605, %v588
        %v607 = vmul.f32 %v606, %v605
        %v608 = vmul.f32 0.5, %v607
        %v609 = vsub.f32 1.5, %v608
        %v610 = vmul.f32 %v605, %v609
        %vm611 = vweird.f32 %v588
        %vm612 = vweird.f32 %v605
        %vm613 = vmor %vm611, %vm612
        %v614 = vsel %vm613, %v605, %v610
        %v615 = vrsqrt.pop %v589
        %v616 = vmul.f32 %v615, %v589
        %v617 = vmul.f32 %v616, %v615
        %v618 = vmul.f32 0.5, %v617
        %v619 = vsub.f32 1.5, %v618
        %v620 = vmul.f32 %v615, %v619
        %vm621 = vweird.f32 %v589
        %vm622 = vweird.f32 %v615
        %vm623 = vmor %vm621, %vm622
        %v624 = vsel %vm623, %v615, %v620
        %v625 = vrsqrt.pop %v590
        %v626 = vmul.f32 %v625, %v590
        %v627 = vmul.f32 %v626, %v625
        %v628 = vmul.f32 0.5, %v627
        %v629 = vsub.f32 1.5, %v628
        %v630 = vmul.f32 %v625, %v629
        %vm631 = vweird.f32 %v590
        %vm632 = vweird.f32 %v625
        %vm633 = vmor %vm631, %vm632
        %v634 = vsel %vm633, %v625, %v630
        %v635 = vrsqrt.pop %v591
        %v636 = vmul.f32 %v635, %v591
        %v637 = vmul.f32 %v636, %v635
        %v638 = vmul.f32 0.5, %v637
        %v639 = vsub.f32 1.5, %v638
        %v640 = vmul.f32 %v635, %v639
        %vm641 = vweird.f32 %v591
        %vm642 = vweird.f32 %v635
        %vm643 = vmor %vm641, %vm642
        %v644 = vsel %vm643, %v635, %v640
        %v645 = vrsqrt.pop %v592
        %v646 = vmul.f32 %v645, %v592
        %v647 = vmul.f32 %v646, %v645
        %v648 = vmul.f32 0.5, %v647
        %v649 = vsub.f32 1.5, %v648
        %v650 = vmul.f32 %v645, %v649
        %vm651 = vweird.f32 %v592
        %vm652 = vweird.f32 %v645
        %vm653 = vmor %vm651, %vm652
        %v654 = vsel %vm653, %v645, %v650
        %v655 = vrsqrt.pop %v593
        %v656 = vmul.f32 %v655, %v593
        %v657 = vmul.f32 %v656, %v655
        %v658 = vmul.f32 0.5, %v657
        %v659 = vsub.f32 1.5, %v658
        %v660 = vmul.f32 %v655, %v659
        %vm661 = vweird.f32 %v593
        %vm662 = vweird.f32 %v655
        %vm663 = vmor %vm661, %vm662
        %v664 = vsel %vm663, %v655, %v660
        %v665 = vrsqrt.pop %v594
        %v666 = vmul.f32 %v665, %v594
        %v667 = vmul.f32 %v666, %v665
        %v668 = vmul.f32 0.5, %v667
        %v669 = vsub.f32 1.5, %v668
        %v670 = vmul.f32 %v665, %v669
        %vm671 = vweird.f32 %v594
        %vm672 = vweird.f32 %v665
        %vm673 = vmor %vm671, %vm672
        %v674 = vsel %vm673, %v665, %v670
        %v675 = vsel %vm314, %v500, %v604
        %v676 = vsel %vm314, %v510, %v614
        %v677 = vsel %vm314, %v520, %v624
        %v678 = vsel %vm314, %v530, %v634
        %v679 = vsel %vm314, %v540, %v644
        %v680 = vsel %vm314, %v550, %v654
        %v681 = vsel %vm314, %v560, %v664
        %v682 = vsel %vm314, %v570, %v674
        %v683 = vmul.f32 %v403, %v675
        %v684 = vmul.f32 %v404, %v676
        %v685 = vmul.f32 %v405, %v677
        %v686 = vmul.f32 %v406, %v678
        %v687 = vmul.f32 %v407, %v679
        %v688 = vmul.f32 %v408, %v680
        %v689 = vmul.f32 %v409, %v681
        %v690 = vmul.f32 %v410, %v682
        %v692 = vperm.slane %v234, 0
        %v694 = vmul.f32 %v683, %v692
        %v695 = vmul.f32 %v684, %v692
        %v696 = vmul.f32 %v685, %v692
        %v697 = vmul.f32 %v686, %v692
        %v698 = vmul.f32 %v687, %v692
        %v699 = vmul.f32 %v688, %v692
        %v700 = vmul.f32 %v689, %v692
        %v701 = vmul.f32 %v690, %v692
        %v703 = vperm.slane %v235, 0
        %v705 = vadd.f32 %v694, %v703
        %v706 = vadd.f32 %v695, %v703
        %v707 = vadd.f32 %v696, %v703
        %v708 = vadd.f32 %v697, %v703
        %v709 = vadd.f32 %v698, %v703
        %v710 = vadd.f32 %v699, %v703
        %v711 = vadd.f32 %v700, %v703
        %v712 = vadd.f32 %v701, %v703
        %713 = vst.msk [vmem:[%s218] sm:$0xff] %vm247, %v705
        %714 = vst.msk [vmem:[%s218 + $0x10] sm:$0xff] %vm247, %v706
        %715 = vst.msk [vmem:[%s218 + $0x20] sm:$0xff] %vm247, %v707
        %716 = vst.msk [vmem:[%s218 + $0x30] sm:$0xff] %vm247, %v708
        %717 = vst.msk [vmem:[%s218 + $0x40] sm:$0xff] %vm247, %v709
        %718 = vst.msk [vmem:[%s218 + $0x50] sm:$0xff] %vm247, %v710
        %719 = vst.msk [vmem:[%s218 + $0x60] sm:$0xff] %vm247, %v711
        %720 = vst.msk [vmem:[%s218 + $0x70] sm:$0xff] %vm247, %v712
        %s721 = scalar_lea.vmem %s1, 32
        %v722 = vld [vmem:[%s721] sm:$0xff]
        %v723 = vld [vmem:[%s721 + $0x8] sm:$0xff]
        %v724 = vld [vmem:[%s721 + $0x10] sm:$0xff]
        %v725 = vld [vmem:[%s721 + $0x18] sm:$0xff]
        %s726 = scalar_lea.vmem %s2, 1
        %v727 = vld [vmem:[%s726] sm:$0x1]
        %v729 = vperm.slane %v727, 0
        %731 = vmatpush.msra.mxu0 0.0
        %732 = vmatpush.msra.mxu0 0.0
        %733 = vmatpush.msra.mxu0 0.0
        %734 = vmatpush.msra.mxu0 0.0
        %735 = vmatpush.msra.mxu0 0.0
        %736 = vmatpush.msra.mxu0 0.0
        %737 = vmatpush.msra.mxu0 0.0
        %738 = vmatpush.msra.mxu0 0.0
        %739 = vmatpush.msra.mxu0 0.0
        %740 = vmatpush.msra.mxu0 0.0
        %741 = vmatpush.msra.mxu0 0.0
        %742 = vmatpush.msra.mxu0 0.0
        %743 = vmatpush.msra.mxu0 %v725
        %744 = vmatpush.msra.mxu0 %v724
        %745 = vmatpush.msra.mxu0 %v723
        %746 = vmatpush.msra.mxu0 %v722
        %747 = vmatmul.f32.gmra.mxu0 %v249
        %v748 = vpop.f32.mrf.mxu0
        %v749 = vadd.f32 %v729, %v748
        %750 = vmatmul.f32.gmra.mxu0 %v252
        %v751 = vpop.f32.mrf.mxu0
        %v752 = vadd.f32 %v729, %v751
        %753 = vmatmul.f32.gmra.mxu0 %v255
        %v754 = vpop.f32.mrf.mxu0
        %v755 = vadd.f32 %v729, %v754
        %756 = vmatmul.f32.gmra.mxu0 %v258
        %v757 = vpop.f32.mrf.mxu0
        %v758 = vadd.f32 %v729, %v757
        %759 = vmatmul.f32.gmra.mxu0 %v261
        %v760 = vpop.f32.mrf.mxu0
        %v761 = vadd.f32 %v729, %v760
        %762 = vmatmul.f32.gmra.mxu0 %v264
        %v763 = vpop.f32.mrf.mxu0
        %v764 = vadd.f32 %v729, %v763
        %765 = vmatmul.f32.gmra.mxu0 %v267
        %v766 = vpop.f32.mrf.mxu0
        %v767 = vadd.f32 %v729, %v766
        %768 = vmatmul.f32.gmra.mxu0 %v270
        %v769 = vpop.f32.mrf.mxu0
        %v770 = vadd.f32 %v729, %v769
        %771 = vdwg.mxu0
        %v772 = vsel %vm314, %v749, 0.0
        %v773 = vsel %vm314, %v752, 0.0
        %v774 = vsel %vm314, %v755, 0.0
        %v775 = vsel %vm314, %v758, 0.0
        %v776 = vsel %vm314, %v761, 0.0
        %v777 = vsel %vm314, %v764, 0.0
        %v778 = vsel %vm314, %v767, 0.0
        %v779 = vsel %vm314, %v770, 0.0
        %v780 = vsel %vm247, %v772, 0.0
        %781 = vadd.xlane.f32.xlu0 %v780
        %v782 = vpop.xlane.xlu0 %781
        %v783 = vsel %vm247, %v773, 0.0
        %784 = vadd.xlane.f32.xlu0 %v783
        %v785 = vpop.xlane.xlu0 %784
        %v786 = vsel %vm247, %v774, 0.0
        %787 = vadd.xlane.f32.xlu0 %v786
        %v788 = vpop.xlane.xlu0 %787
        %v789 = vsel %vm247, %v775, 0.0
        %790 = vadd.xlane.f32.xlu0 %v789
        %v791 = vpop.xlane.xlu0 %790
        %v792 = vsel %vm247, %v776, 0.0
        %793 = vadd.xlane.f32.xlu0 %v792
        %v794 = vpop.xlane.xlu0 %793
        %v795 = vsel %vm247, %v777, 0.0
        %796 = vadd.xlane.f32.xlu0 %v795
        %v797 = vpop.xlane.xlu0 %796
        %v798 = vsel %vm247, %v778, 0.0
        %799 = vadd.xlane.f32.xlu0 %v798
        %v800 = vpop.xlane.xlu0 %799
        %v801 = vsel %vm247, %v779, 0.0
        %802 = vadd.xlane.f32.xlu0 %v801
        %v803 = vpop.xlane.xlu0 %802
        %v804 = vsel %vm247, %v749, 0.0
        %805 = vadd.xlane.f32.xlu0 %v804
        %v806 = vpop.xlane.xlu0 %805
        %v807 = vsel %vm247, %v752, 0.0
        %808 = vadd.xlane.f32.xlu0 %v807
        %v809 = vpop.xlane.xlu0 %808
        %v810 = vsel %vm247, %v755, 0.0
        %811 = vadd.xlane.f32.xlu0 %v810
        %v812 = vpop.xlane.xlu0 %811
        %v813 = vsel %vm247, %v758, 0.0
        %814 = vadd.xlane.f32.xlu0 %v813
        %v815 = vpop.xlane.xlu0 %814
        %v816 = vsel %vm247, %v761, 0.0
        %817 = vadd.xlane.f32.xlu0 %v816
        %v818 = vpop.xlane.xlu0 %817
        %v819 = vsel %vm247, %v764, 0.0
        %820 = vadd.xlane.f32.xlu0 %v819
        %v821 = vpop.xlane.xlu0 %820
        %v822 = vsel %vm247, %v767, 0.0
        %823 = vadd.xlane.f32.xlu0 %v822
        %v824 = vpop.xlane.xlu0 %823
        %v825 = vsel %vm247, %v770, 0.0
        %826 = vadd.xlane.f32.xlu0 %v825
        %v827 = vpop.xlane.xlu0 %826
        %v828 = vmul.f32 %v782, 0.0625
        %v829 = vmul.f32 %v785, 0.0625
        %v830 = vmul.f32 %v788, 0.0625
        %v831 = vmul.f32 %v791, 0.0625
        %v832 = vmul.f32 %v794, 0.0625
        %v833 = vmul.f32 %v797, 0.0625
        %v834 = vmul.f32 %v800, 0.0625
        %v835 = vmul.f32 %v803, 0.0625
        %v836 = vsub.f32 %v806, %v782
        %v837 = vsub.f32 %v809, %v785
        %v838 = vsub.f32 %v812, %v788
        %v839 = vsub.f32 %v815, %v791
        %v840 = vsub.f32 %v818, %v794
        %v841 = vsub.f32 %v821, %v797
        %v842 = vsub.f32 %v824, %v800
        %v843 = vsub.f32 %v827, %v803
        %v844 = vmul.f32 %v836, 0.0625
        %v845 = vmul.f32 %v837, 0.0625
        %v846 = vmul.f32 %v838, 0.0625
        %v847 = vmul.f32 %v839, 0.0625
        %v848 = vmul.f32 %v840, 0.0625
        %v849 = vmul.f32 %v841, 0.0625
        %v850 = vmul.f32 %v842, 0.0625
        %v851 = vmul.f32 %v843, 0.0625
        %v852 = vsel %vm314, %v828, %v844
        %v853 = vsel %vm314, %v829, %v845
        %v854 = vsel %vm314, %v830, %v846
        %v855 = vsel %vm314, %v831, %v847
        %v856 = vsel %vm314, %v832, %v848
        %v857 = vsel %vm314, %v833, %v849
        %v858 = vsel %vm314, %v834, %v850
        %v859 = vsel %vm314, %v835, %v851
        %v860 = vsub.f32 %v749, %v852
        %v861 = vsub.f32 %v752, %v853
        %v862 = vsub.f32 %v755, %v854
        %v863 = vsub.f32 %v758, %v855
        %v864 = vsub.f32 %v761, %v856
        %v865 = vsub.f32 %v764, %v857
        %v866 = vsub.f32 %v767, %v858
        %v867 = vsub.f32 %v770, %v859
        %v868 = vmul.f32 %v860, %v860
        %v869 = vmul.f32 %v861, %v861
        %v870 = vmul.f32 %v862, %v862
        %v871 = vmul.f32 %v863, %v863
        %v872 = vmul.f32 %v864, %v864
        %v873 = vmul.f32 %v865, %v865
        %v874 = vmul.f32 %v866, %v866
        %v875 = vmul.f32 %v867, %v867
        %v876 = vsel %vm314, %v868, 0.0
        %v877 = vsel %vm314, %v869, 0.0
        %v878 = vsel %vm314, %v870, 0.0
        %v879 = vsel %vm314, %v871, 0.0
        %v880 = vsel %vm314, %v872, 0.0
        %v881 = vsel %vm314, %v873, 0.0
        %v882 = vsel %vm314, %v874, 0.0
        %v883 = vsel %vm314, %v875, 0.0
        %v884 = vsel %vm247, %v876, 0.0
        %885 = vadd.xlane.f32.xlu0 %v884
        %v886 = vpop.xlane.xlu0 %885
        %v887 = vsel %vm247, %v877, 0.0
        %888 = vadd.xlane.f32.xlu0 %v887
        %v889 = vpop.xlane.xlu0 %888
        %v890 = vsel %vm247, %v878, 0.0
        %891 = vadd.xlane.f32.xlu0 %v890
        %v892 = vpop.xlane.xlu0 %891
        %v893 = vsel %vm247, %v879, 0.0
        %894 = vadd.xlane.f32.xlu0 %v893
        %v895 = vpop.xlane.xlu0 %894
        %v896 = vsel %vm247, %v880, 0.0
        %897 = vadd.xlane.f32.xlu0 %v896
        %v898 = vpop.xlane.xlu0 %897
        %v899 = vsel %vm247, %v881, 0.0
        %900 = vadd.xlane.f32.xlu0 %v899
        %v901 = vpop.xlane.xlu0 %900
        %v902 = vsel %vm247, %v882, 0.0
        %903 = vadd.xlane.f32.xlu0 %v902
        %v904 = vpop.xlane.xlu0 %903
        %v905 = vsel %vm247, %v883, 0.0
        %906 = vadd.xlane.f32.xlu0 %v905
        %v907 = vpop.xlane.xlu0 %906
        %v908 = vsel %vm247, %v868, 0.0
        %909 = vadd.xlane.f32.xlu0 %v908
        %v910 = vpop.xlane.xlu0 %909
        %v911 = vsel %vm247, %v869, 0.0
        %912 = vadd.xlane.f32.xlu0 %v911
        %v913 = vpop.xlane.xlu0 %912
        %v914 = vsel %vm247, %v870, 0.0
        %915 = vadd.xlane.f32.xlu0 %v914
        %v916 = vpop.xlane.xlu0 %915
        %v917 = vsel %vm247, %v871, 0.0
        %918 = vadd.xlane.f32.xlu0 %v917
        %v919 = vpop.xlane.xlu0 %918
        %v920 = vsel %vm247, %v872, 0.0
        %921 = vadd.xlane.f32.xlu0 %v920
        %v922 = vpop.xlane.xlu0 %921
        %v923 = vsel %vm247, %v873, 0.0
        %924 = vadd.xlane.f32.xlu0 %v923
        %v925 = vpop.xlane.xlu0 %924
        %v926 = vsel %vm247, %v874, 0.0
        %927 = vadd.xlane.f32.xlu0 %v926
        %v928 = vpop.xlane.xlu0 %927
        %v929 = vsel %vm247, %v875, 0.0
        %930 = vadd.xlane.f32.xlu0 %v929
        %v931 = vpop.xlane.xlu0 %930
        %v932 = vmul.f32 %v886, 0.0625
        %v933 = vmul.f32 %v889, 0.0625
        %v934 = vmul.f32 %v892, 0.0625
        %v935 = vmul.f32 %v895, 0.0625
        %v936 = vmul.f32 %v898, 0.0625
        %v937 = vmul.f32 %v901, 0.0625
        %v938 = vmul.f32 %v904, 0.0625
        %v939 = vmul.f32 %v907, 0.0625
        %v940 = vadd.f32 %v932, 1e-05
        %v941 = vadd.f32 %v933, 1e-05
        %v942 = vadd.f32 %v934, 1e-05
        %v943 = vadd.f32 %v935, 1e-05
        %v944 = vadd.f32 %v936, 1e-05
        %v945 = vadd.f32 %v937, 1e-05
        %v946 = vadd.f32 %v938, 1e-05
        %v947 = vadd.f32 %v939, 1e-05
        %v948 = vrsqrt.pop %v940
        %v949 = vmul.f32 %v948, %v940
        %v950 = vmul.f32 %v949, %v948
        %v951 = vmul.f32 0.5, %v950
        %v952 = vsub.f32 1.5, %v951
        %v953 = vmul.f32 %v948, %v952
        %vm954 = vweird.f32 %v940
        %vm955 = vweird.f32 %v948
        %vm956 = vmor %vm954, %vm955
        %v957 = vsel %vm956, %v948, %v953
        %v958 = vrsqrt.pop %v941
        %v959 = vmul.f32 %v958, %v941
        %v960 = vmul.f32 %v959, %v958
        %v961 = vmul.f32 0.5, %v960
        %v962 = vsub.f32 1.5, %v961
        %v963 = vmul.f32 %v958, %v962
        %vm964 = vweird.f32 %v941
        %vm965 = vweird.f32 %v958
        %vm966 = vmor %vm964, %vm965
        %v967 = vsel %vm966, %v958, %v963
        %v968 = vrsqrt.pop %v942
        %v969 = vmul.f32 %v968, %v942
        %v970 = vmul.f32 %v969, %v968
        %v971 = vmul.f32 0.5, %v970
        %v972 = vsub.f32 1.5, %v971
        %v973 = vmul.f32 %v968, %v972
        %vm974 = vweird.f32 %v942
        %vm975 = vweird.f32 %v968
        %vm976 = vmor %vm974, %vm975
        %v977 = vsel %vm976, %v968, %v973
        %v978 = vrsqrt.pop %v943
        %v979 = vmul.f32 %v978, %v943
        %v980 = vmul.f32 %v979, %v978
        %v981 = vmul.f32 0.5, %v980
        %v982 = vsub.f32 1.5, %v981
        %v983 = vmul.f32 %v978, %v982
        %vm984 = vweird.f32 %v943
        %vm985 = vweird.f32 %v978
        %vm986 = vmor %vm984, %vm985
        %v987 = vsel %vm986, %v978, %v983
        %v988 = vrsqrt.pop %v944
        %v989 = vmul.f32 %v988, %v944
        %v990 = vmul.f32 %v989, %v988
        %v991 = vmul.f32 0.5, %v990
        %v992 = vsub.f32 1.5, %v991
        %v993 = vmul.f32 %v988, %v992
        %vm994 = vweird.f32 %v944
        %vm995 = vweird.f32 %v988
        %vm996 = vmor %vm994, %vm995
        %v997 = vsel %vm996, %v988, %v993
        %v998 = vrsqrt.pop %v945
        %v999 = vmul.f32 %v998, %v945
        %v1000 = vmul.f32 %v999, %v998
        %v1001 = vmul.f32 0.5, %v1000
        %v1002 = vsub.f32 1.5, %v1001
        %v1003 = vmul.f32 %v998, %v1002
        %vm1004 = vweird.f32 %v945
        %vm1005 = vweird.f32 %v998
        %vm1006 = vmor %vm1004, %vm1005
        %v1007 = vsel %vm1006, %v998, %v1003
        %v1008 = vrsqrt.pop %v946
        %v1009 = vmul.f32 %v1008, %v946
        %v1010 = vmul.f32 %v1009, %v1008
        %v1011 = vmul.f32 0.5, %v1010
        %v1012 = vsub.f32 1.5, %v1011
        %v1013 = vmul.f32 %v1008, %v1012
        %vm1014 = vweird.f32 %v946
        %vm1015 = vweird.f32 %v1008
        %vm1016 = vmor %vm1014, %vm1015
        %v1017 = vsel %vm1016, %v1008, %v1013
        %v1018 = vrsqrt.pop %v947
        %v1019 = vmul.f32 %v1018, %v947
        %v1020 = vmul.f32 %v1019, %v1018
        %v1021 = vmul.f32 0.5, %v1020
        %v1022 = vsub.f32 1.5, %v1021
        %v1023 = vmul.f32 %v1018, %v1022
        %vm1024 = vweird.f32 %v947
        %vm1025 = vweird.f32 %v1018
        %vm1026 = vmor %vm1024, %vm1025
        %v1027 = vsel %vm1026, %v1018, %v1023
        %v1028 = vsub.f32 %v910, %v886
        %v1029 = vsub.f32 %v913, %v889
        %v1030 = vsub.f32 %v916, %v892
        %v1031 = vsub.f32 %v919, %v895
        %v1032 = vsub.f32 %v922, %v898
        %v1033 = vsub.f32 %v925, %v901
        %v1034 = vsub.f32 %v928, %v904
        %v1035 = vsub.f32 %v931, %v907
        %v1036 = vmul.f32 %v1028, 0.0625
        %v1037 = vmul.f32 %v1029, 0.0625
        %v1038 = vmul.f32 %v1030, 0.0625
        %v1039 = vmul.f32 %v1031, 0.0625
        %v1040 = vmul.f32 %v1032, 0.0625
        %v1041 = vmul.f32 %v1033, 0.0625
        %v1042 = vmul.f32 %v1034, 0.0625
        %v1043 = vmul.f32 %v1035, 0.0625
        %v1044 = vadd.f32 %v1036, 1e-05
        %v1045 = vadd.f32 %v1037, 1e-05
        %v1046 = vadd.f32 %v1038, 1e-05
        %v1047 = vadd.f32 %v1039, 1e-05
        %v1048 = vadd.f32 %v1040, 1e-05
        %v1049 = vadd.f32 %v1041, 1e-05
        %v1050 = vadd.f32 %v1042, 1e-05
        %v1051 = vadd.f32 %v1043, 1e-05
        %v1052 = vrsqrt.pop %v1044
        %v1053 = vmul.f32 %v1052, %v1044
        %v1054 = vmul.f32 %v1053, %v1052
        %v1055 = vmul.f32 0.5, %v1054
        %v1056 = vsub.f32 1.5, %v1055
        %v1057 = vmul.f32 %v1052, %v1056
        %vm1058 = vweird.f32 %v1044
        %vm1059 = vweird.f32 %v1052
        %vm1060 = vmor %vm1058, %vm1059
        %v1061 = vsel %vm1060, %v1052, %v1057
        %v1062 = vrsqrt.pop %v1045
        %v1063 = vmul.f32 %v1062, %v1045
        %v1064 = vmul.f32 %v1063, %v1062
        %v1065 = vmul.f32 0.5, %v1064
        %v1066 = vsub.f32 1.5, %v1065
        %v1067 = vmul.f32 %v1062, %v1066
        %vm1068 = vweird.f32 %v1045
        %vm1069 = vweird.f32 %v1062
        %vm1070 = vmor %vm1068, %vm1069
        %v1071 = vsel %vm1070, %v1062, %v1067
        %v1072 = vrsqrt.pop %v1046
        %v1073 = vmul.f32 %v1072, %v1046
        %v1074 = vmul.f32 %v1073, %v1072
        %v1075 = vmul.f32 0.5, %v1074
        %v1076 = vsub.f32 1.5, %v1075
        %v1077 = vmul.f32 %v1072, %v1076
        %vm1078 = vweird.f32 %v1046
        %vm1079 = vweird.f32 %v1072
        %vm1080 = vmor %vm1078, %vm1079
        %v1081 = vsel %vm1080, %v1072, %v1077
        %v1082 = vrsqrt.pop %v1047
        %v1083 = vmul.f32 %v1082, %v1047
        %v1084 = vmul.f32 %v1083, %v1082
        %v1085 = vmul.f32 0.5, %v1084
        %v1086 = vsub.f32 1.5, %v1085
        %v1087 = vmul.f32 %v1082, %v1086
        %vm1088 = vweird.f32 %v1047
        %vm1089 = vweird.f32 %v1082
        %vm1090 = vmor %vm1088, %vm1089
        %v1091 = vsel %vm1090, %v1082, %v1087
        %v1092 = vrsqrt.pop %v1048
        %v1093 = vmul.f32 %v1092, %v1048
        %v1094 = vmul.f32 %v1093, %v1092
        %v1095 = vmul.f32 0.5, %v1094
        %v1096 = vsub.f32 1.5, %v1095
        %v1097 = vmul.f32 %v1092, %v1096
        %vm1098 = vweird.f32 %v1048
        %vm1099 = vweird.f32 %v1092
        %vm1100 = vmor %vm1098, %vm1099
        %v1101 = vsel %vm1100, %v1092, %v1097
        %v1102 = vrsqrt.pop %v1049
        %v1103 = vmul.f32 %v1102, %v1049
        %v1104 = vmul.f32 %v1103, %v1102
        %v1105 = vmul.f32 0.5, %v1104
        %v1106 = vsub.f32 1.5, %v1105
        %v1107 = vmul.f32 %v1102, %v1106
        %vm1108 = vweird.f32 %v1049
        %vm1109 = vweird.f32 %v1102
        %vm1110 = vmor %vm1108, %vm1109
        %v1111 = vsel %vm1110, %v1102, %v1107
        %v1112 = vrsqrt.pop %v1050
        %v1113 = vmul.f32 %v1112, %v1050
        %v1114 = vmul.f32 %v1113, %v1112
        %v1115 = vmul.f32 0.5, %v1114
        %v1116 = vsub.f32 1.5, %v1115
        %v1117 = vmul.f32 %v1112, %v1116
        %vm1118 = vweird.f32 %v1050
        %vm1119 = vweird.f32 %v1112
        %vm1120 = vmor %vm1118, %vm1119
        %v1121 = vsel %vm1120, %v1112, %v1117
        %v1122 = vrsqrt.pop %v1051
        %v1123 = vmul.f32 %v1122, %v1051
        %v1124 = vmul.f32 %v1123, %v1122
        %v1125 = vmul.f32 0.5, %v1124
        %v1126 = vsub.f32 1.5, %v1125
        %v1127 = vmul.f32 %v1122, %v1126
        %vm1128 = vweird.f32 %v1051
        %vm1129 = vweird.f32 %v1122
        %vm1130 = vmor %vm1128, %vm1129
        %v1131 = vsel %vm1130, %v1122, %v1127
        %v1132 = vsel %vm314, %v957, %v1061
        %v1133 = vsel %vm314, %v967, %v1071
        %v1134 = vsel %vm314, %v977, %v1081
        %v1135 = vsel %vm314, %v987, %v1091
        %v1136 = vsel %vm314, %v997, %v1101
        %v1137 = vsel %vm314, %v1007, %v1111
        %v1138 = vsel %vm314, %v1017, %v1121
        %v1139 = vsel %vm314, %v1027, %v1131
        %v1140 = vmul.f32 %v860, %v1132
        %v1141 = vmul.f32 %v861, %v1133
        %v1142 = vmul.f32 %v862, %v1134
        %v1143 = vmul.f32 %v863, %v1135
        %v1144 = vmul.f32 %v864, %v1136
        %v1145 = vmul.f32 %v865, %v1137
        %v1146 = vmul.f32 %v866, %v1138
        %v1147 = vmul.f32 %v867, %v1139
        %v1148 = vmul.f32 %v1140, %v692
        %v1149 = vmul.f32 %v1141, %v692
        %v1150 = vmul.f32 %v1142, %v692
        %v1151 = vmul.f32 %v1143, %v692
        %v1152 = vmul.f32 %v1144, %v692
        %v1153 = vmul.f32 %v1145, %v692
        %v1154 = vmul.f32 %v1146, %v692
        %v1155 = vmul.f32 %v1147, %v692
        %v1156 = vadd.f32 %v1148, %v703
        %v1157 = vadd.f32 %v1149, %v703
        %v1158 = vadd.f32 %v1150, %v703
        %v1159 = vadd.f32 %v1151, %v703
        %v1160 = vadd.f32 %v1152, %v703
        %v1161 = vadd.f32 %v1153, %v703
        %v1162 = vadd.f32 %v1154, %v703
        %v1163 = vadd.f32 %v1155, %v703
        %s1164 = scalar_lea.vmem %s218, 8 [#allocation2]
        %1165 = vst.msk [vmem:[%s1164] sm:$0xff] %vm247, %v1156
        %1166 = vst.msk [vmem:[%s1164 + $0x10] sm:$0xff] %vm247, %v1157
        %1167 = vst.msk [vmem:[%s1164 + $0x20] sm:$0xff] %vm247, %v1158
        %1168 = vst.msk [vmem:[%s1164 + $0x30] sm:$0xff] %vm247, %v1159
        %1169 = vst.msk [vmem:[%s1164 + $0x40] sm:$0xff] %vm247, %v1160
        %1170 = vst.msk [vmem:[%s1164 + $0x50] sm:$0xff] %vm247, %v1161
        %1171 = vst.msk [vmem:[%s1164 + $0x60] sm:$0xff] %vm247, %v1162
        %1172 = vst.msk [vmem:[%s1164 + $0x70] sm:$0xff] %vm247, %v1163
        %s1173 = sand.u32 %s137, 1
        %s1174 = scalar_lea.sflag [#allocation3], %s1173
        %s1175 = sand.u32 %s137, 1
        %s1176 = smul.addr %s1175, 128
        %s1177 = scalar_lea.vmem [#allocation2], %s1176
        // Predicated region
        $region41: #{tpu_custom_call.1} parent=39 // pred_check
          %p1178 = pneg %p147
        $region42: #{tpu_custom_call.1} parent=39 // pred_check_branch
          %1180 = sbr.rel (%p1178) target = $region44
        $region43: #{tpu_custom_call.1} parent=39 // pred_region
          %s1181 = smul.u32 8, %s19
          %1183 = vsyncadd %s1174, 0
          %s1184 = smul.addr %s1181, 2
          %s1185 = smul.addr %s1184, 8
          %s1186 = scalar_lea.hbm %s5, %s1185
          %s1187 = sshll.u32 %s1177, 4
          %s1188 = int_to_ptr.vmem [resolvable:$true] %s1187
          %s1189 = sshll.u32 %s1186, 4
          %s1190 = int_to_ptr.hbm [resolvable:$true] %s1189
          %1195 = dma.vmem_to_hbm [thread:$0]  %s1188, 2048, %s1190, %s1174, 128, 128, 8
        $region44: #{tpu_custom_call.1} parent=39 // pred_fallthru
          _
      $region40: #{tpu_custom_call.1} parent=5 // pred_fallthru
        _
      %p1196 = scmp.le.s32.totalorder 2, %s14
      // Predicated region
      $region45: #{tpu_custom_call.1} parent=5 // pred_check
        %p1197 = pneg %p1196
      $region46: #{tpu_custom_call.1} parent=5 // pred_check_branch
        %1199 = sbr.rel (%p1197) target = $region48
      $region47: #{tpu_custom_call.1} parent=5 // pred_region
        %s1200 = ssub.s32 %s14, 2
        // Predicated region
        $region49: #{tpu_custom_call.1} parent=47 // pred_check
          %p1201 = pneg %p153
        $region50: #{tpu_custom_call.1} parent=47 // pred_check_branch
          %1203 = sbr.rel (%p1201) target = $region52
        $region51: #{tpu_custom_call.1} parent=47 // pred_region
          %s1204 = sand.u32 %s138, 1
          %s1205 = scalar_lea.sflag [#allocation3], %s1204
          %s1206 = sand.u32 %s138, 1
          %s1207 = smul.addr %s1206, 128
          %s1208 = scalar_lea.vmem [#allocation2], %s1207
          %1210 = dma.done %s1205, 2048
        $region52: #{tpu_custom_call.1} parent=47 // pred_fallthru
          _
      $region48: #{tpu_custom_call.1} parent=5 // pred_fallthru
        _
    $region6: #{tpu_custom_call.1} parent=1 // loop_footer
      %s18 = sadd.s32 1, %s14
    $region7: #{tpu_custom_call.1} parent=1 // loop_footer_branch
      %13 = sbr.rel target = $region3
    $region8: #{tpu_custom_call.1} parent=1 // loop_exit
      _
    %1211 = vsyncpa [#allocation3], 1
    %s1212 = scalar_lea.sflag [#allocation3], 1
    %1213 = vsyncpa %s1212, 1

</llo_original>
